<compile_context>
chip_gen: v7x
topology: tpu7x:2x2x1
jax: 0.10.0
libtpu: 0.0.40
codegen_flags: <defaults>
</compile_context>

<pallas_src>
import jax
import jax.numpy as jnp
from jax.experimental import pallas as pl
from jax.experimental.pallas import tpu as pltpu

# Small shapes consistent with the module (batch, seq, hidden).
B, S, H = 2, 8, 32
NH, HD = 4, 8            # num heads, head dim (NH * HD == H)
I = 64                   # FFN intermediate size
NUM_LAYERS = 2

# ---- layout of the packed per-layer bias / LayerNorm blob -------------------
_VEC_FIELDS = (('bqkv', 3 * H), ('bo', H), ('ln1_g', H), ('ln1_b', H),
               ('b1', I), ('b2', H), ('ln2_g', H), ('ln2_b', H))
_VEC_OFF = {}
_off = 0
for _name, _size in _VEC_FIELDS:
    _VEC_OFF[_name] = (_off, _off + _size)
    _off += _size
VTOT = _off              # 352


def _vec_slice(vec, name):
    lo, hi = _VEC_OFF[name]
    return vec[:, lo:hi]


def _layernorm(x, gamma, beta, eps=1e-12):
    mu = jnp.mean(x, axis=-1, keepdims=True)
    var = jnp.mean((x - mu) ** 2, axis=-1, keepdims=True)
    return (x - mu) * jax.lax.rsqrt(var + eps) * gamma + beta


# -----------------------------------------------------------------------------
# Fused encoder-stack kernel: one grid step per layer, activation stays in VMEM.
# -----------------------------------------------------------------------------
def encoder_stack_kernel(x_ref, mask_ref, wqkv_ref, wo_ref, w1_ref, w2_ref,
                         vec_ref, out_ref):
    layer = pl.program_id(0)

    # out_ref is the VMEM-resident activation (same block for every layer);
    # seed it with the input activation on the first layer only.
    @pl.when(layer == 0)
    def _():
        out_ref[...] = x_ref[...]

    x = out_ref[...]                                   # (B, S, H)
    mask = mask_ref[...]                               # (B, S)
    # Additive attention bias, broadcast ONCE (hoisted out of per-head code).
    bias = ((1.0 - mask) * -1e9)[None, :, None, :]     # (1, B, 1, S)

    wqkv = wqkv_ref[0]                                 # (H, 3H)
    wo = wo_ref[0]                                     # (H, H)
    w1 = w1_ref[0]                                     # (H, I)
    w2 = w2_ref[0]                                     # (I, H)
    vec = vec_ref[0]                                   # (1, VTOT)

    # ---- fused QKV projection: one MXU matmul, N = 3H = 96 ------------------
    qkv = jnp.einsum('bsh,hd->bsd', x, wqkv,
                     preferred_element_type=jnp.float32) + _vec_slice(vec, 'bqkv')

    # ---- multi-head attention ------------------------------------------------
    scale = 1.0 / (HD ** 0.5)
    # Per-head score matmuls (single-batch-dim einsums lower cleanly on TPU),
    # stacked on a leading head axis so the softmax runs ONCE over all heads.
    scores = jnp.stack(
        [jnp.einsum('bqd,bkd->bqk',
                    qkv[:, :, h * HD:(h + 1) * HD],               # q_h
                    qkv[:, :, H + h * HD:H + (h + 1) * HD],       # k_h
                    preferred_element_type=jnp.float32)
         for h in range(NH)], axis=0) * scale                     # (NH, B, S, S)
    scores = scores + bias
    scores = scores - jnp.max(scores, axis=-1, keepdims=True)
    p = jnp.exp(scores)
    p = p * pl.reciprocal(jnp.sum(p, axis=-1, keepdims=True), approx=True)

    ctx = jnp.concatenate(
        [jnp.einsum('bqk,bkd->bqd', p[h],
                    qkv[:, :, 2 * H + h * HD:2 * H + (h + 1) * HD],  # v_h
                    preferred_element_type=jnp.float32)
         for h in range(NH)], axis=-1)                            # (B, S, H)

    attn = jnp.einsum('bsh,hd->bsd', ctx, wo,
                      preferred_element_type=jnp.float32) + _vec_slice(vec, 'bo')
    y = _layernorm(x + attn, _vec_slice(vec, 'ln1_g'), _vec_slice(vec, 'ln1_b'))

    # ---- feed-forward ---------------------------------------------------------
    h1 = jnp.einsum('bsh,hi->bsi', y, w1,
                    preferred_element_type=jnp.float32) + _vec_slice(vec, 'b1')
    # tanh-approx GELU (EUP friendly).
    # TODO(synk): use exact erf GELU if the wrapped layers use erf-based nn.GELU.
    h1 = 0.5 * h1 * (1.0 + jnp.tanh(0.7978845608028654
                                    * (h1 + 0.044715 * h1 * h1 * h1)))
    ffn = jnp.einsum('bsi,ih->bsh', h1, w2,
                     preferred_element_type=jnp.float32) + _vec_slice(vec, 'b2')

    out_ref[...] = _layernorm(y + ffn,
                              _vec_slice(vec, 'ln2_g'), _vec_slice(vec, 'ln2_b'))


# -----------------------------------------------------------------------------
# Wrapper: one pallas_call for the whole NLPSequential forward pass.
# -----------------------------------------------------------------------------
def _nlp_sequential_forward(x, mask, wqkv, wo, w1, w2, vec):
    num_layers = wqkv.shape[0]
    return pl.pallas_call(
        encoder_stack_kernel,
        out_shape=jax.ShapeDtypeStruct((B, S, H), jnp.float32),
        grid_spec=pltpu.PrefetchScalarGridSpec(
            num_scalar_prefetch=0,
            grid=(num_layers,),
            in_specs=[
                pl.BlockSpec((B, S, H), lambda l: (0, 0, 0)),        # x (read @ l==0)
                pl.BlockSpec((B, S), lambda l: (0, 0)),              # mask
                pl.BlockSpec((1, H, 3 * H), lambda l: (l, 0, 0)),    # wqkv (stacked)
                pl.BlockSpec((1, H, H), lambda l: (l, 0, 0)),        # wo
                pl.BlockSpec((1, H, I), lambda l: (l, 0, 0)),        # w1
                pl.BlockSpec((1, I, H), lambda l: (l, 0, 0)),        # w2
                pl.BlockSpec((1, 1, VTOT), lambda l: (l, 0, 0)),     # bias/LN blob
            ],
            out_specs=pl.BlockSpec((B, S, H), lambda l: (0, 0, 0)),  # resident act.
        ),
        compiler_params=pltpu.CompilerParams(
            dimension_semantics=("arbitrary",)),
    )(x, mask, wqkv, wo, w1, w2, vec)


nlp_sequential_forward = jax.jit(_nlp_sequential_forward)


# -----------------------------------------------------------------------------
# Parameter construction / packing
# -----------------------------------------------------------------------------
def make_layer_params(key):
    ks = jax.random.split(key, 16)

    def w(k, shape, fan_in):
        return jax.random.normal(k, shape, jnp.float32) * (fan_in ** -0.5)

    def b(k, n):
        return 0.1 * jax.random.normal(k, (1, n), jnp.float32)

    return {
        'wq': w(ks[0], (H, H), H), 'bq': b(ks[1], H),
        'wk': w(ks[2], (H, H), H), 'bk': b(ks[3], H),
        'wv': w(ks[4], (H, H), H), 'bv': b(ks[5], H),
        'wo': w(ks[6], (H, H), H), 'bo': b(ks[7], H),
        'ln1_g': 1.0 + b(ks[8], H), 'ln1_b': b(ks[9], H),
        'w1': w(ks[10], (H, I), H), 'b1': b(ks[11], I),
        'w2': w(ks[12], (I, H), I), 'b2': b(ks[13], H),
        'ln2_g': 1.0 + b(ks[14], H), 'ln2_b': b(ks[15], H),
    }


def pack_params(layer_params):
    wqkv = jnp.stack([jnp.concatenate([p['wq'], p['wk'], p['wv']], axis=1)
                      for p in layer_params])                     # (L, H, 3H)
    wo = jnp.stack([p['wo'] for p in layer_params])               # (L, H, H)
    w1 = jnp.stack([p['w1'] for p in layer_params])               # (L, H, I)
    w2 = jnp.stack([p['w2'] for p in layer_params])               # (L, I, H)
    vec = jnp.stack([jnp.concatenate(
        [p['bq'], p['bk'], p['bv'], p['bo'], p['ln1_g'], p['ln1_b'],
         p['b1'], p['b2'], p['ln2_g'], p['ln2_b']], axis=1)
        for p in layer_params])                                   # (L, 1, VTOT)
    return wqkv, wo, w1, w2, vec


# -----------------------------------------------------------------------------
# Pure-JAX reference (mirrors NLPSequential.forward over BERT encoder layers)
# -----------------------------------------------------------------------------
def reference_forward(x, mask, layer_params):
    out = x
    addm = (1.0 - mask) * -1e9
    for p in layer_params:
        q = out @ p['wq'] + p['bq']
        k = out @ p['wk'] + p['bk']
        v = out @ p['wv'] + p['bv']
        qh = q.reshape(B, S, NH, HD).transpose(0, 2, 1, 3)
        kh = k.reshape(B, S, NH, HD).transpose(0, 2, 1, 3)
        vh = v.reshape(B, S, NH, HD).transpose(0, 2, 1, 3)
        s = jnp.einsum('bnqd,bnkd->bnqk', qh, kh) / (HD ** 0.5)
        s = s + addm[:, None, None, :]
        a = jax.nn.softmax(s, axis=-1)
        ctx = jnp.einsum('bnqk,bnkd->bnqd', a, vh)
        ctx = ctx.transpose(0, 2, 1, 3).reshape(B, S, H)
        attn = ctx @ p['wo'] + p['bo']
        y = _layernorm(out + attn, p['ln1_g'], p['ln1_b'])
        h1 = y @ p['w1'] + p['b1']
        h1 = 0.5 * h1 * (1.0 + jnp.tanh(0.7978845608028654
                                        * (h1 + 0.044715 * h1 ** 3)))
        ffn = h1 @ p['w2'] + p['b2']
        out = _layernorm(y + ffn, p['ln2_g'], p['ln2_b'])
    return out


if __name__ == "__main__":
    key = jax.random.PRNGKey(0)
    k_x, k_layers = jax.random.split(key)

    x = jax.random.normal(k_x, (B, S, H), jnp.float32)
    # mask: 1.0 = valid token, 0.0 = padding (second sequence has 2 pads).
    mask = jnp.array([[1.0] * S,
                      [1.0] * (S - 2) + [0.0] * 2], dtype=jnp.float32)

    layer_params = tuple(make_layer_params(k)
                         for k in jax.random.split(k_layers, NUM_LAYERS))
    wqkv, wo, w1, w2, vec = pack_params(layer_params)

    out = nlp_sequential_forward(x, mask, wqkv, wo, w1, w2, vec)
    jax.block_until_ready(out)

    assert out.shape == (B, S, H)
    assert bool(jnp.all(jnp.isfinite(out)))
    ref = reference_forward(x, mask, layer_params)
    max_err = float(jnp.max(jnp.abs(out - ref)))
    assert max_err < 1e-1, f"kernel/reference mismatch: max abs err {max_err}"
    print("KERNEL_OK")
</pallas_src>

<mosaic_0001>
module attributes {stable_mosaic.version = 11 : i64} {
  func.func @encoder_stack_kernel(%arg0: i32, %arg1: memref<2x8x32xf32, #tpu.memory_space<vmem>>, %arg2: memref<2x8xf32, #tpu.memory_space<vmem>>, %arg3: memref<1x32x96xf32, #tpu.memory_space<vmem>>, %arg4: memref<1x32x32xf32, #tpu.memory_space<vmem>>, %arg5: memref<1x32x64xf32, #tpu.memory_space<vmem>>, %arg6: memref<1x64x32xf32, #tpu.memory_space<vmem>>, %arg7: memref<1x1x352xf32, #tpu.memory_space<vmem>>, %arg8: memref<2x8x32xf32, #tpu.memory_space<vmem>>) attributes {dimension_semantics = [#tpu.dimension_semantics<arbitrary>], iteration_bounds = array<i64: 2>, scalar_prefetch = 0 : i64, scratch_operands = 0 : i64, tpu.core_type = #tpu.core_type<tc>, window_params = [{pipeline_mode = #tpu.pipeline_mode<synchronous>, transform_indices = @transform_0, window_bounds = array<i64: 2, 8, 32>}, {pipeline_mode = #tpu.pipeline_mode<synchronous>, transform_indices = @transform_1, window_bounds = array<i64: 2, 8>}, {transform_indices = @transform_2, window_bounds = array<i64: 1, 32, 96>}, {transform_indices = @transform_3, window_bounds = array<i64: 1, 32, 32>}, {transform_indices = @transform_4, window_bounds = array<i64: 1, 32, 64>}, {transform_indices = @transform_5, window_bounds = array<i64: 1, 64, 32>}, {transform_indices = @transform_6, window_bounds = array<i64: 1, 1, 352>}, {pipeline_mode = #tpu.pipeline_mode<synchronous>, transform_indices = @transform_7, window_bounds = array<i64: 2, 8, 32>}]} {
    %c0_i32 = arith.constant 0 : i32
    %0 = arith.cmpi eq, %arg0, %c0_i32 : i32
    %1 = arith.extui %0 : i1 to i32
    %c0_i32_0 = arith.constant 0 : i32
    %2 = arith.cmpi ne, %1, %c0_i32_0 : i32
    scf.if %2 {
      %c0_53 = arith.constant 0 : index
      %c0_54 = arith.constant 0 : index
      %c0_55 = arith.constant 0 : index
      %156 = vector.load %arg1[%c0_53, %c0_54, %c0_55] : memref<2x8x32xf32, #tpu.memory_space<vmem>>, vector<2x8x32xf32>
      %c0_56 = arith.constant 0 : index
      %c0_57 = arith.constant 0 : index
      %c0_58 = arith.constant 0 : index
      %157 = vector.load %arg8[%c0_56, %c0_57, %c0_58] : memref<2x8x32xf32, #tpu.memory_space<vmem>>, vector<2x8x32xf32>
      tpu.vector_store %arg8[%c0_56, %c0_57, %c0_58], %156 {strides = array<i32>} : memref<2x8x32xf32, #tpu.memory_space<vmem>>, vector<2x8x32xf32>,
    } else {
    }
    %c0 = arith.constant 0 : index
    %c0_1 = arith.constant 0 : index
    %c0_2 = arith.constant 0 : index
    %3 = vector.load %arg8[%c0, %c0_1, %c0_2] : memref<2x8x32xf32, #tpu.memory_space<vmem>>, vector<2x8x32xf32>
    %c0_3 = arith.constant 0 : index
    %c0_4 = arith.constant 0 : index
    %4 = vector.load %arg2[%c0_3, %c0_4] : memref<2x8xf32, #tpu.memory_space<vmem>>, vector<2x8xf32>
    %cst = arith.constant 1.000000e+00 : f32
    %5 = vector.broadcast %cst : f32 to vector<2x8xf32>
    %6 = arith.subf %5, %4 : vector<2x8xf32>
    %cst_5 = arith.constant -1.000000e+09 : f32
    %7 = vector.broadcast %cst_5 : f32 to vector<2x8xf32>
    %8 = arith.mulf %6, %7 : vector<2x8xf32>
    %9 = vector.shape_cast %8 : vector<2x8xf32> to vector<1x2x1x8xf32>
    %c0_6 = arith.constant 0 : index
    %c0_7 = arith.constant 0 : index
    %c0_8 = arith.constant 0 : index
    %10 = vector.load %arg3[%c0_6, %c0_7, %c0_8] : memref<1x32x96xf32, #tpu.memory_space<vmem>>, vector<1x32x96xf32>
    %11 = vector.shape_cast %10 : vector<1x32x96xf32> to vector<32x96xf32>
    %c0_9 = arith.constant 0 : index
    %c0_10 = arith.constant 0 : index
    %c0_11 = arith.constant 0 : index
    %12 = vector.load %arg4[%c0_9, %c0_10, %c0_11] : memref<1x32x32xf32, #tpu.memory_space<vmem>>, vector<1x32x32xf32>
    %13 = vector.shape_cast %12 : vector<1x32x32xf32> to vector<32x32xf32>
    %c0_12 = arith.constant 0 : index
    %c0_13 = arith.constant 0 : index
    %c0_14 = arith.constant 0 : index
    %14 = vector.load %arg5[%c0_12, %c0_13, %c0_14] : memref<1x32x64xf32, #tpu.memory_space<vmem>>, vector<1x32x64xf32>
    %15 = vector.shape_cast %14 : vector<1x32x64xf32> to vector<32x64xf32>
    %c0_15 = arith.constant 0 : index
    %c0_16 = arith.constant 0 : index
    %c0_17 = arith.constant 0 : index
    %16 = vector.load %arg6[%c0_15, %c0_16, %c0_17] : memref<1x64x32xf32, #tpu.memory_space<vmem>>, vector<1x64x32xf32>
    %17 = vector.shape_cast %16 : vector<1x64x32xf32> to vector<64x32xf32>
    %c0_18 = arith.constant 0 : index
    %c0_19 = arith.constant 0 : index
    %c0_20 = arith.constant 0 : index
    %18 = vector.load %arg7[%c0_18, %c0_19, %c0_20] : memref<1x1x352xf32, #tpu.memory_space<vmem>>, vector<1x1x352xf32>
    %19 = vector.shape_cast %18 : vector<1x1x352xf32> to vector<1x352xf32>
    "tpu.trace_start"() <{level = 10 : i32, message = "bsh,hd->bsd"}> : () -> ()
    %cst_21 = arith.constant dense<0.000000e+00> : vector<2x8x96xf32>
    %20 = tpu.matmul %3, %11, %cst_21 {dimension_numbers = #tpu.dot_dimension_numbers<[2], [0], [0, 1], [1], [0, 0, 0, 1, 1, 1], [], []>} : vector<2x8x32xf32>, vector<32x96xf32>, vector<2x8x96xf32> -> vector<2x8x96xf32>
    "tpu.trace_stop"() : () -> ()
    %21 = vector.extract_strided_slice %19 {offsets = [0, 0], sizes = [1, 96], strides = [1, 1]} : vector<1x352xf32> to vector<1x96xf32>
    %22 = vector.shape_cast %21 : vector<1x96xf32> to vector<1x1x96xf32>
    %23 = vector.broadcast %22 : vector<1x1x96xf32> to vector<2x8x96xf32>
    %24 = arith.addf %20, %23 : vector<2x8x96xf32>
    %25 = vector.extract_strided_slice %24 {offsets = [0, 0, 0], sizes = [2, 8, 8], strides = [1, 1, 1]} : vector<2x8x96xf32> to vector<2x8x8xf32>
    %26 = vector.extract_strided_slice %24 {offsets = [0, 0, 32], sizes = [2, 8, 8], strides = [1, 1, 1]} : vector<2x8x96xf32> to vector<2x8x8xf32>
    "tpu.trace_start"() <{level = 10 : i32, message = "bqd,bkd->bqk"}> : () -> ()
    %cst_22 = arith.constant dense<0.000000e+00> : vector<2x8x8xf32>
    %27 = tpu.matmul %25, %26, %cst_22 {dimension_numbers = #tpu.dot_dimension_numbers<[2], [2], [1], [1], [0, 0, 0, 1, 1, 1], [0], [0]>} : vector<2x8x8xf32>, vector<2x8x8xf32>, vector<2x8x8xf32> -> vector<2x8x8xf32>
    "tpu.trace_stop"() : () -> ()
    %28 = vector.extract_strided_slice %24 {offsets = [0, 0, 8], sizes = [2, 8, 8], strides = [1, 1, 1]} : vector<2x8x96xf32> to vector<2x8x8xf32>
    %29 = vector.extract_strided_slice %24 {offsets = [0, 0, 40], sizes = [2, 8, 8], strides = [1, 1, 1]} : vector<2x8x96xf32> to vector<2x8x8xf32>
    "tpu.trace_start"() <{level = 10 : i32, message = "bqd,bkd->bqk"}> : () -> ()
    %cst_23 = arith.constant dense<0.000000e+00> : vector<2x8x8xf32>
    %30 = tpu.matmul %28, %29, %cst_23 {dimension_numbers = #tpu.dot_dimension_numbers<[2], [2], [1], [1], [0, 0, 0, 1, 1, 1], [0], [0]>} : vector<2x8x8xf32>, vector<2x8x8xf32>, vector<2x8x8xf32> -> vector<2x8x8xf32>
    "tpu.trace_stop"() : () -> ()
    %31 = vector.extract_strided_slice %24 {offsets = [0, 0, 16], sizes = [2, 8, 8], strides = [1, 1, 1]} : vector<2x8x96xf32> to vector<2x8x8xf32>
    %32 = vector.extract_strided_slice %24 {offsets = [0, 0, 48], sizes = [2, 8, 8], strides = [1, 1, 1]} : vector<2x8x96xf32> to vector<2x8x8xf32>
    "tpu.trace_start"() <{level = 10 : i32, message = "bqd,bkd->bqk"}> : () -> ()
    %cst_24 = arith.constant dense<0.000000e+00> : vector<2x8x8xf32>
    %33 = tpu.matmul %31, %32, %cst_24 {dimension_numbers = #tpu.dot_dimension_numbers<[2], [2], [1], [1], [0, 0, 0, 1, 1, 1], [0], [0]>} : vector<2x8x8xf32>, vector<2x8x8xf32>, vector<2x8x8xf32> -> vector<2x8x8xf32>
    "tpu.trace_stop"() : () -> ()
    %34 = vector.extract_strided_slice %24 {offsets = [0, 0, 24], sizes = [2, 8, 8], strides = [1, 1, 1]} : vector<2x8x96xf32> to vector<2x8x8xf32>
    %35 = vector.extract_strided_slice %24 {offsets = [0, 0, 56], sizes = [2, 8, 8], strides = [1, 1, 1]} : vector<2x8x96xf32> to vector<2x8x8xf32>
    "tpu.trace_start"() <{level = 10 : i32, message = "bqd,bkd->bqk"}> : () -> ()
    %cst_25 = arith.constant dense<0.000000e+00> : vector<2x8x8xf32>
    %36 = tpu.matmul %34, %35, %cst_25 {dimension_numbers = #tpu.dot_dimension_numbers<[2], [2], [1], [1], [0, 0, 0, 1, 1, 1], [0], [0]>} : vector<2x8x8xf32>, vector<2x8x8xf32>, vector<2x8x8xf32> -> vector<2x8x8xf32>
    "tpu.trace_stop"() : () -> ()
    %37 = vector.shape_cast %27 : vector<2x8x8xf32> to vector<1x2x8x8xf32>
    %38 = vector.shape_cast %30 : vector<2x8x8xf32> to vector<1x2x8x8xf32>
    %39 = vector.shape_cast %33 : vector<2x8x8xf32> to vector<1x2x8x8xf32>
    %40 = vector.shape_cast %36 : vector<2x8x8xf32> to vector<1x2x8x8xf32>
    %41 = tpu.concatenate %37, %38, %39, %40 in 0 : vector<1x2x8x8xf32>, vector<1x2x8x8xf32>, vector<1x2x8x8xf32>, vector<1x2x8x8xf32> -> vector<4x2x8x8xf32>
    %cst_26 = arith.constant 0.353553385 : f32
    %42 = vector.broadcast %cst_26 : f32 to vector<4x2x8x8xf32>
    %43 = arith.mulf %41, %42 : vector<4x2x8x8xf32>
    %44 = vector.broadcast %9 : vector<1x2x1x8xf32> to vector<4x2x8x8xf32>
    %45 = arith.addf %43, %44 : vector<4x2x8x8xf32>
    %cst_27 = arith.constant dense<0xFF800000> : vector<4x2x8xf32>
    %46 = vector.multi_reduction <maximumf>, %45, %cst_27 [3] : vector<4x2x8x8xf32> to vector<4x2x8xf32>
    %47 = vector.shape_cast %46 : vector<4x2x8xf32> to vector<4x2x8x1xf32>
    %48 = vector.broadcast %47 : vector<4x2x8x1xf32> to vector<4x2x8x8xf32>
    %49 = arith.subf %45, %48 : vector<4x2x8x8xf32>
    %50 = math.exp %49 : vector<4x2x8x8xf32>
    %cst_28 = arith.constant dense<0.000000e+00> : vector<4x2x8xf32>
    %51 = vector.multi_reduction <add>, %50, %cst_28 [3] : vector<4x2x8x8xf32> to vector<4x2x8xf32>
    %52 = vector.shape_cast %51 : vector<4x2x8xf32> to vector<4x2x8x1xf32>
    %53 = tpu.reciprocal %52 {approx = true} : vector<4x2x8x1xf32> -> vector<4x2x8x1xf32>
    %54 = vector.broadcast %53 : vector<4x2x8x1xf32> to vector<4x2x8x8xf32>
    %55 = arith.mulf %50, %54 : vector<4x2x8x8xf32>
    %56 = vector.extract_strided_slice %55 {offsets = [0, 0, 0, 0], sizes = [1, 2, 8, 8], strides = [1, 1, 1, 1]} : vector<4x2x8x8xf32> to vector<1x2x8x8xf32>
    %57 = vector.shape_cast %56 : vector<1x2x8x8xf32> to vector<2x8x8xf32>
    %58 = vector.extract_strided_slice %24 {offsets = [0, 0, 64], sizes = [2, 8, 8], strides = [1, 1, 1]} : vector<2x8x96xf32> to vector<2x8x8xf32>
    "tpu.trace_start"() <{level = 10 : i32, message = "bqk,bkd->bqd"}> : () -> ()
    %cst_29 = arith.constant dense<0.000000e+00> : vector<2x8x8xf32>
    %59 = tpu.matmul %57, %58, %cst_29 {dimension_numbers = #tpu.dot_dimension_numbers<[2], [1], [1], [2], [0, 0, 0, 1, 1, 2], [0], [0]>} : vector<2x8x8xf32>, vector<2x8x8xf32>, vector<2x8x8xf32> -> vector<2x8x8xf32>
    "tpu.trace_stop"() : () -> ()
    %60 = vector.extract_strided_slice %55 {offsets = [1, 0, 0, 0], sizes = [1, 2, 8, 8], strides = [1, 1, 1, 1]} : vector<4x2x8x8xf32> to vector<1x2x8x8xf32>
    %61 = vector.shape_cast %60 : vector<1x2x8x8xf32> to vector<2x8x8xf32>
    %62 = vector.extract_strided_slice %24 {offsets = [0, 0, 72], sizes = [2, 8, 8], strides = [1, 1, 1]} : vector<2x8x96xf32> to vector<2x8x8xf32>
    "tpu.trace_start"() <{level = 10 : i32, message = "bqk,bkd->bqd"}> : () -> ()
    %cst_30 = arith.constant dense<0.000000e+00> : vector<2x8x8xf32>
    %63 = tpu.matmul %61, %62, %cst_30 {dimension_numbers = #tpu.dot_dimension_numbers<[2], [1], [1], [2], [0, 0, 0, 1, 1, 2], [0], [0]>} : vector<2x8x8xf32>, vector<2x8x8xf32>, vector<2x8x8xf32> -> vector<2x8x8xf32>
    "tpu.trace_stop"() : () -> ()
    %64 = vector.extract_strided_slice %55 {offsets = [2, 0, 0, 0], sizes = [1, 2, 8, 8], strides = [1, 1, 1, 1]} : vector<4x2x8x8xf32> to vector<1x2x8x8xf32>
    %65 = vector.shape_cast %64 : vector<1x2x8x8xf32> to vector<2x8x8xf32>
    %66 = vector.extract_strided_slice %24 {offsets = [0, 0, 80], sizes = [2, 8, 8], strides = [1, 1, 1]} : vector<2x8x96xf32> to vector<2x8x8xf32>
    "tpu.trace_start"() <{level = 10 : i32, message = "bqk,bkd->bqd"}> : () -> ()
    %cst_31 = arith.constant dense<0.000000e+00> : vector<2x8x8xf32>
    %67 = tpu.matmul %65, %66, %cst_31 {dimension_numbers = #tpu.dot_dimension_numbers<[2], [1], [1], [2], [0, 0, 0, 1, 1, 2], [0], [0]>} : vector<2x8x8xf32>, vector<2x8x8xf32>, vector<2x8x8xf32> -> vector<2x8x8xf32>
    "tpu.trace_stop"() : () -> ()
    %68 = vector.extract_strided_slice %55 {offsets = [3, 0, 0, 0], sizes = [1, 2, 8, 8], strides = [1, 1, 1, 1]} : vector<4x2x8x8xf32> to vector<1x2x8x8xf32>
    %69 = vector.shape_cast %68 : vector<1x2x8x8xf32> to vector<2x8x8xf32>
    %70 = vector.extract_strided_slice %24 {offsets = [0, 0, 88], sizes = [2, 8, 8], strides = [1, 1, 1]} : vector<2x8x96xf32> to vector<2x8x8xf32>
    "tpu.trace_start"() <{level = 10 : i32, message = "bqk,bkd->bqd"}> : () -> ()
    %cst_32 = arith.constant dense<0.000000e+00> : vector<2x8x8xf32>
    %71 = tpu.matmul %69, %70, %cst_32 {dimension_numbers = #tpu.dot_dimension_numbers<[2], [1], [1], [2], [0, 0, 0, 1, 1, 2], [0], [0]>} : vector<2x8x8xf32>, vector<2x8x8xf32>, vector<2x8x8xf32> -> vector<2x8x8xf32>
    "tpu.trace_stop"() : () -> ()
    %72 = tpu.concatenate %59, %63, %67, %71 in 2 : vector<2x8x8xf32>, vector<2x8x8xf32>, vector<2x8x8xf32>, vector<2x8x8xf32> -> vector<2x8x32xf32>
    "tpu.trace_start"() <{level = 10 : i32, message = "bsh,hd->bsd"}> : () -> ()
    %cst_33 = arith.constant dense<0.000000e+00> : vector<2x8x32xf32>
    %73 = tpu.matmul %72, %13, %cst_33 {dimension_numbers = #tpu.dot_dimension_numbers<[2], [0], [0, 1], [1], [0, 0, 0, 1, 1, 1], [], []>} : vector<2x8x32xf32>, vector<32x32xf32>, vector<2x8x32xf32> -> vector<2x8x32xf32>
    "tpu.trace_stop"() : () -> ()
    %74 = vector.extract_strided_slice %19 {offsets = [0, 96], sizes = [1, 32], strides = [1, 1]} : vector<1x352xf32> to vector<1x32xf32>
    %75 = vector.shape_cast %74 : vector<1x32xf32> to vector<1x1x32xf32>
    %76 = vector.broadcast %75 : vector<1x1x32xf32> to vector<2x8x32xf32>
    %77 = arith.addf %73, %76 : vector<2x8x32xf32>
    %78 = arith.addf %3, %77 : vector<2x8x32xf32>
    %79 = vector.extract_strided_slice %19 {offsets = [0, 128], sizes = [1, 32], strides = [1, 1]} : vector<1x352xf32> to vector<1x32xf32>
    %80 = vector.extract_strided_slice %19 {offsets = [0, 160], sizes = [1, 32], strides = [1, 1]} : vector<1x352xf32> to vector<1x32xf32>
    %cst_34 = arith.constant dense<0.000000e+00> : vector<2x8xf32>
    %81 = vector.multi_reduction <add>, %78, %cst_34 [2] : vector<2x8x32xf32> to vector<2x8xf32>
    %82 = vector.shape_cast %81 : vector<2x8xf32> to vector<2x8x1xf32>
    %cst_35 = arith.constant 3.200000e+01 : f32
    %83 = vector.broadcast %cst_35 : f32 to vector<2x8x1xf32>
    %84 = arith.divf %82, %83 : vector<2x8x1xf32>
    %85 = vector.broadcast %84 : vector<2x8x1xf32> to vector<2x8x32xf32>
    %86 = arith.subf %78, %85 : vector<2x8x32xf32>
    %87 = arith.mulf %86, %86 : vector<2x8x32xf32>
    %cst_36 = arith.constant dense<0.000000e+00> : vector<2x8xf32>
    %88 = vector.multi_reduction <add>, %87, %cst_36 [2] : vector<2x8x32xf32> to vector<2x8xf32>
    %89 = vector.shape_cast %88 : vector<2x8xf32> to vector<2x8x1xf32>
    %cst_37 = arith.constant 3.200000e+01 : f32
    %90 = vector.broadcast %cst_37 : f32 to vector<2x8x1xf32>
    %91 = arith.divf %89, %90 : vector<2x8x1xf32>
    %92 = vector.broadcast %84 : vector<2x8x1xf32> to vector<2x8x32xf32>
    %93 = arith.subf %78, %92 : vector<2x8x32xf32>
    %cst_38 = arith.constant 9.99999996E-13 : f32
    %94 = vector.broadcast %cst_38 : f32 to vector<2x8x1xf32>
    %95 = arith.addf %91, %94 : vector<2x8x1xf32>
    %96 = math.rsqrt %95 : vector<2x8x1xf32>
    %97 = vector.broadcast %96 : vector<2x8x1xf32> to vector<2x8x32xf32>
    %98 = arith.mulf %93, %97 : vector<2x8x32xf32>
    %99 = vector.shape_cast %79 : vector<1x32xf32> to vector<1x1x32xf32>
    %100 = vector.broadcast %99 : vector<1x1x32xf32> to vector<2x8x32xf32>
    %101 = arith.mulf %98, %100 : vector<2x8x32xf32>
    %102 = vector.shape_cast %80 : vector<1x32xf32> to vector<1x1x32xf32>
    %103 = vector.broadcast %102 : vector<1x1x32xf32> to vector<2x8x32xf32>
    %104 = arith.addf %101, %103 : vector<2x8x32xf32>
    "tpu.trace_start"() <{level = 10 : i32, message = "bsh,hi->bsi"}> : () -> ()
    %cst_39 = arith.constant dense<0.000000e+00> : vector<2x8x64xf32>
    %105 = tpu.matmul %104, %15, %cst_39 {dimension_numbers = #tpu.dot_dimension_numbers<[2], [0], [0, 1], [1], [0, 0, 0, 1, 1, 1], [], []>} : vector<2x8x32xf32>, vector<32x64xf32>, vector<2x8x64xf32> -> vector<2x8x64xf32>
    "tpu.trace_stop"() : () -> ()
    %106 = vector.extract_strided_slice %19 {offsets = [0, 192], sizes = [1, 64], strides = [1, 1]} : vector<1x352xf32> to vector<1x64xf32>
    %107 = vector.shape_cast %106 : vector<1x64xf32> to vector<1x1x64xf32>
    %108 = vector.broadcast %107 : vector<1x1x64xf32> to vector<2x8x64xf32>
    %109 = arith.addf %105, %108 : vector<2x8x64xf32>
    %cst_40 = arith.constant 5.000000e-01 : f32
    %110 = vector.broadcast %cst_40 : f32 to vector<2x8x64xf32>
    %111 = arith.mulf %110, %109 : vector<2x8x64xf32>
    %cst_41 = arith.constant 4.471500e-02 : f32
    %112 = vector.broadcast %cst_41 : f32 to vector<2x8x64xf32>
    %113 = arith.mulf %112, %109 : vector<2x8x64xf32>
    %114 = arith.mulf %113, %109 : vector<2x8x64xf32>
    %115 = arith.mulf %114, %109 : vector<2x8x64xf32>
    %116 = arith.addf %109, %115 : vector<2x8x64xf32>
    %cst_42 = arith.constant 0.797884583 : f32
    %117 = vector.broadcast %cst_42 : f32 to vector<2x8x64xf32>
    %118 = arith.mulf %117, %116 : vector<2x8x64xf32>
    %119 = math.tanh %118 : vector<2x8x64xf32>
    %cst_43 = arith.constant 1.000000e+00 : f32
    %120 = vector.broadcast %cst_43 : f32 to vector<2x8x64xf32>
    %121 = arith.addf %120, %119 : vector<2x8x64xf32>
    %122 = arith.mulf %111, %121 : vector<2x8x64xf32>
    "tpu.trace_start"() <{level = 10 : i32, message = "bsi,ih->bsh"}> : () -> ()
    %cst_44 = arith.constant dense<0.000000e+00> : vector<2x8x32xf32>
    %123 = tpu.matmul %122, %17, %cst_44 {dimension_numbers = #tpu.dot_dimension_numbers<[2], [0], [0, 1], [1], [0, 0, 0, 1, 1, 1], [], []>} : vector<2x8x64xf32>, vector<64x32xf32>, vector<2x8x32xf32> -> vector<2x8x32xf32>
    "tpu.trace_stop"() : () -> ()
    %124 = vector.extract_strided_slice %19 {offsets = [0, 256], sizes = [1, 32], strides = [1, 1]} : vector<1x352xf32> to vector<1x32xf32>
    %125 = vector.shape_cast %124 : vector<1x32xf32> to vector<1x1x32xf32>
    %126 = vector.broadcast %125 : vector<1x1x32xf32> to vector<2x8x32xf32>
    %127 = arith.addf %123, %126 : vector<2x8x32xf32>
    %128 = arith.addf %104, %127 : vector<2x8x32xf32>
    %129 = vector.extract_strided_slice %19 {offsets = [0, 288], sizes = [1, 32], strides = [1, 1]} : vector<1x352xf32> to vector<1x32xf32>
    %130 = vector.extract_strided_slice %19 {offsets = [0, 320], sizes = [1, 32], strides = [1, 1]} : vector<1x352xf32> to vector<1x32xf32>
    %cst_45 = arith.constant dense<0.000000e+00> : vector<2x8xf32>
    %131 = vector.multi_reduction <add>, %128, %cst_45 [2] : vector<2x8x32xf32> to vector<2x8xf32>
    %132 = vector.shape_cast %131 : vector<2x8xf32> to vector<2x8x1xf32>
    %cst_46 = arith.constant 3.200000e+01 : f32
    %133 = vector.broadcast %cst_46 : f32 to vector<2x8x1xf32>
    %134 = arith.divf %132, %133 : vector<2x8x1xf32>
    %135 = vector.broadcast %134 : vector<2x8x1xf32> to vector<2x8x32xf32>
    %136 = arith.subf %128, %135 : vector<2x8x32xf32>
    %137 = arith.mulf %136, %136 : vector<2x8x32xf32>
    %cst_47 = arith.constant dense<0.000000e+00> : vector<2x8xf32>
    %138 = vector.multi_reduction <add>, %137, %cst_47 [2] : vector<2x8x32xf32> to vector<2x8xf32>
    %139 = vector.shape_cast %138 : vector<2x8xf32> to vector<2x8x1xf32>
    %cst_48 = arith.constant 3.200000e+01 : f32
    %140 = vector.broadcast %cst_48 : f32 to vector<2x8x1xf32>
    %141 = arith.divf %139, %140 : vector<2x8x1xf32>
    %142 = vector.broadcast %134 : vector<2x8x1xf32> to vector<2x8x32xf32>
    %143 = arith.subf %128, %142 : vector<2x8x32xf32>
    %cst_49 = arith.constant 9.99999996E-13 : f32
    %144 = vector.broadcast %cst_49 : f32 to vector<2x8x1xf32>
    %145 = arith.addf %141, %144 : vector<2x8x1xf32>
    %146 = math.rsqrt %145 : vector<2x8x1xf32>
    %147 = vector.broadcast %146 : vector<2x8x1xf32> to vector<2x8x32xf32>
    %148 = arith.mulf %143, %147 : vector<2x8x32xf32>
    %149 = vector.shape_cast %129 : vector<1x32xf32> to vector<1x1x32xf32>
    %150 = vector.broadcast %149 : vector<1x1x32xf32> to vector<2x8x32xf32>
    %151 = arith.mulf %148, %150 : vector<2x8x32xf32>
    %152 = vector.shape_cast %130 : vector<1x32xf32> to vector<1x1x32xf32>
    %153 = vector.broadcast %152 : vector<1x1x32xf32> to vector<2x8x32xf32>
    %154 = arith.addf %151, %153 : vector<2x8x32xf32>
    %c0_50 = arith.constant 0 : index
    %c0_51 = arith.constant 0 : index
    %c0_52 = arith.constant 0 : index
    %155 = vector.load %arg8[%c0_50, %c0_51, %c0_52] : memref<2x8x32xf32, #tpu.memory_space<vmem>>, vector<2x8x32xf32>
    tpu.vector_store %arg8[%c0_50, %c0_51, %c0_52], %154 {strides = array<i32>} : memref<2x8x32xf32, #tpu.memory_space<vmem>>, vector<2x8x32xf32>,
    return
  }
  func.func @transform_0(%arg0: i32) -> (i32, i32, i32) {
    %c0_i32 = arith.constant 0 : i32
    %c0_i32_0 = arith.constant 0 : i32
    %c0_i32_1 = arith.constant 0 : i32
    %c0_i32_2 = arith.constant 0 : i32
    return %c0_i32, %c0_i32_0, %c0_i32_1 : i32, i32, i32
  }
  func.func @transform_1(%arg0: i32) -> (i32, i32) {
    %c0_i32 = arith.constant 0 : i32
    %c0_i32_0 = arith.constant 0 : i32
    %c0_i32_1 = arith.constant 0 : i32
    return %c0_i32, %c0_i32_0 : i32, i32
  }
  func.func @transform_2(%arg0: i32) -> (i32, i32, i32) {
    %c0_i32 = arith.constant 0 : i32
    %c0_i32_0 = arith.constant 0 : i32
    %c0_i32_1 = arith.constant 0 : i32
    return %arg0, %c0_i32, %c0_i32_0 : i32, i32, i32
  }
  func.func @transform_3(%arg0: i32) -> (i32, i32, i32) {
    %c0_i32 = arith.constant 0 : i32
    %c0_i32_0 = arith.constant 0 : i32
    %c0_i32_1 = arith.constant 0 : i32
    return %arg0, %c0_i32, %c0_i32_0 : i32, i32, i32
  }
  func.func @transform_4(%arg0: i32) -> (i32, i32, i32) {
    %c0_i32 = arith.constant 0 : i32
    %c0_i32_0 = arith.constant 0 : i32
    %c0_i32_1 = arith.constant 0 : i32
    return %arg0, %c0_i32, %c0_i32_0 : i32, i32, i32
  }
  func.func @transform_5(%arg0: i32) -> (i32, i32, i32) {
    %c0_i32 = arith.constant 0 : i32
    %c0_i32_0 = arith.constant 0 : i32
    %c0_i32_1 = arith.constant 0 : i32
    return %arg0, %c0_i32, %c0_i32_0 : i32, i32, i32
  }
  func.func @transform_6(%arg0: i32) -> (i32, i32, i32) {
    %c0_i32 = arith.constant 0 : i32
    %c0_i32_0 = arith.constant 0 : i32
    %c0_i32_1 = arith.constant 0 : i32
    return %arg0, %c0_i32, %c0_i32_0 : i32, i32, i32
  }
  func.func @transform_7(%arg0: i32) -> (i32, i32, i32) {
    %c0_i32 = arith.constant 0 : i32
    %c0_i32_0 = arith.constant 0 : i32
    %c0_i32_1 = arith.constant 0 : i32
    %c0_i32_2 = arith.constant 0 : i32
    return %c0_i32, %c0_i32_0, %c0_i32_1 : i32, i32, i32
  }
}

</mosaic_0001>

<llo_original>
// kernel: _nlp_sequential_forward.1
$region0: #{_nlp_sequential_forward.1}
  #allocation0 [shape = 'u32[]', space=smem, size = 0x4, offset = 0x4, fixed_abs, tag = 'smem constant byte address 0x4 - core index']
  #allocation1 [shape = 'u32[144,128]{1,0:T(1,128)}', space=vmem, size = 0x12000, scoped, tag = 'internal scratch']
  %s0 = inlined_call_operand.hbm [shape: f32[2,8,32], index: 0, kind: input, shape index: {}]
  %s1 = inlined_call_operand.hbm [shape: f32[2,8], index: 1, kind: input, shape index: {}]
  %s2 = inlined_call_operand.vmem [shape: f32[2,32,96], index: 2, kind: input, shape index: {}]
  %s3 = inlined_call_operand.vmem [shape: f32[2,32,32], index: 3, kind: input, shape index: {}]
  %s4 = inlined_call_operand.vmem [shape: f32[2,32,64], index: 4, kind: input, shape index: {}]
  %s5 = inlined_call_operand.vmem [shape: f32[2,64,32], index: 5, kind: input, shape index: {}]
  %s6 = inlined_call_operand.vmem [shape: f32[2,1,352], index: 6, kind: input, shape index: {}]
  %s7 = inlined_call_operand.hbm [shape: f32[2,8,32], index: 7, kind: output, shape index: {}]
  %s8 = sld [smem:[#allocation0]]
  $region73: #{_nlp_sequential_forward.1} parent=0
    _
  %s10 = ssub.s32 1, %s8
  %s11 = scalar_select 0, %s10, %s8
  $region1: #{_nlp_sequential_forward.1} parent=0
    #allocation2 [shape = 'u8[8192]{0}', space=vmem, size = 0x2000, scoped, tag = 'input window, operand 0, single buffered']
    #allocation3 [shape = 's32[2]{0}', space=sflag, size = 0x8, scoped, tag = 'scoped memory for _nlp_sequential_forward.1']
    #allocation4 [shape = 's32[2]{0}', space=sflag, size = 0x8, scoped, tag = 'scoped memory for _nlp_sequential_forward.1']
    #allocation5 [shape = 'u8[1024]{0}', space=vmem, size = 0x400, scoped, tag = 'input window, operand 1, single buffered']
    #allocation6 [shape = 's32[1]{0}', space=sflag, size = 0x4, scoped, tag = 'scoped memory for _nlp_sequential_forward.1']
    #allocation7 [shape = 'u8[8192]{0}', space=vmem, size = 0x2000, scoped, tag = 'output window, operand 0, single buffered']
    %12 = vsyncpa [#allocation3], 0
    %13 = vsyncpa [#allocation6], 0
    %14 = vsyncpa [#allocation4], 0
    loop: start=0, step=1, limit=4
    $region2: #{_nlp_sequential_forward.1} parent=1 // loop_pre_header
      _
    $region3: #{_nlp_sequential_forward.1} parent=1 // loop_header
      %s16 = sphi 0, %s20
      %p17 = scmp.ge.s32.totalorder %s16, 4
      %s24 = sphi 0, %s24
      %s26 = sphi 0, %s24
      %s27 = sphi 0, %s26
      %s41 = sphi 0, %s27
      %s45 = sphi 0, %s45
      %s47 = sphi 0, %s45
      %s48 = sphi 0, %s47
      %s62 = sphi 0, %s48
      %s68 = sphi 0, %s70
      %s71 = sphi 0, %s68
      %s72 = sphi 0, %s71
      %s88 = sphi 0, %s72
      %s94 = sphi 0, %s96
      %s97 = sphi 0, %s94
      %s98 = sphi 0, %s97
      %s114 = sphi 0, %s98
      %s120 = sphi 0, %s122
      %s123 = sphi 0, %s120
      %s124 = sphi 0, %s123
      %s140 = sphi 0, %s124
      %s146 = sphi 0, %s148
      %s149 = sphi 0, %s146
      %s150 = sphi 0, %s149
      %s166 = sphi 0, %s150
      %s172 = sphi 0, %s174
      %s175 = sphi 0, %s172
      %s176 = sphi 0, %s175
      %s192 = sphi 0, %s176
      %s196 = sphi 0, %s196
      %s198 = sphi 0, %s196
      %s199 = sphi 0, %s198
      %s213 = sphi 0, %s199
    $region4: #{_nlp_sequential_forward.1} parent=1 // loop_header_branch
      %19 = sbr.rel (%p17) target = $region8
    $region5: #{_nlp_sequential_forward.1} parent=1 // loop_body
      %s21 = ssub.s32 %s16, 1
      %s22 = ssub.s32 %s16, 2
      %s23 = sadd.s32 %s16, 1
      %s25 = sadd.s32 %s24, 1
      %p28 = scmp.eq.s32.totalorder %s16, 1
      %p29 = scmp.ne.s32.totalorder %s24, %s26
      %p30 = scmp.eq.s32.totalorder %s16, 0
      %p31 = por %p29, %p30
      %p32 = scmp.ne.s32.totalorder %s24, %s26
      %p33 = scmp.eq.s32.totalorder %s21, 1
      %p34 = por %p32, %p33
      %p35 = scmp.ne.s32.totalorder %s26, %s27
      %p36 = scmp.eq.s32.totalorder %s21, 0
      %p37 = por %p35, %p36
      %p38 = scmp.ne.s32.totalorder %s26, %s27
      %p39 = scmp.eq.s32.totalorder %s22, 1
      %p40 = por %p38, %p39
      %p42 = scmp.ne.s32.totalorder %s27, %s41
      %p43 = scmp.eq.s32.totalorder %s22, 0
      %p44 = por %p42, %p43
      %s46 = sadd.s32 %s45, 1
      %p49 = scmp.eq.s32.totalorder %s16, 1
      %p50 = scmp.ne.s32.totalorder %s45, %s47
      %p51 = scmp.eq.s32.totalorder %s16, 0
      %p52 = por %p50, %p51
      %p53 = scmp.ne.s32.totalorder %s45, %s47
      %p54 = scmp.eq.s32.totalorder %s21, 1
      %p55 = por %p53, %p54
      %p56 = scmp.ne.s32.totalorder %s47, %s48
      %p57 = scmp.eq.s32.totalorder %s21, 0
      %p58 = por %p56, %p57
      %p59 = scmp.ne.s32.totalorder %s47, %s48
      %p60 = scmp.eq.s32.totalorder %s22, 1
      %p61 = por %p59, %p60
      %p63 = scmp.ne.s32.totalorder %s48, %s62
      %p64 = scmp.eq.s32.totalorder %s22, 0
      %p65 = por %p63, %p64
      %s66 = ssub.s32 %s16, %s23
      %p67 = scmp.eq.s32.totalorder %s66, 0
      %s69 = sadd.s32 %s68, 1
      %s70 = scalar_select %p67, %s68, %s69
      %p73 = pneg %p67
      %p74 = scmp.eq.s32.totalorder %s16, 1
      %p75 = por %p73, %p74
      %p76 = scmp.ne.s32.totalorder %s68, %s71
      %p77 = scmp.eq.s32.totalorder %s16, 0
      %p78 = por %p76, %p77
      %p79 = scmp.ne.s32.totalorder %s68, %s71
      %p80 = scmp.eq.s32.totalorder %s21, 1
      %p81 = por %p79, %p80
      %p82 = scmp.ne.s32.totalorder %s71, %s72
      %p83 = scmp.eq.s32.totalorder %s21, 0
      %p84 = por %p82, %p83
      %p85 = scmp.ne.s32.totalorder %s71, %s72
      %p86 = scmp.eq.s32.totalorder %s22, 1
      %p87 = por %p85, %p86
      %p89 = scmp.ne.s32.totalorder %s72, %s88
      %p90 = scmp.eq.s32.totalorder %s22, 0
      %p91 = por %p89, %p90
      %s92 = ssub.s32 %s16, %s23
      %p93 = scmp.eq.s32.totalorder %s92, 0
      %s95 = sadd.s32 %s94, 1
      %s96 = scalar_select %p93, %s94, %s95
      %p99 = pneg %p93
      %p100 = scmp.eq.s32.totalorder %s16, 1
      %p101 = por %p99, %p100
      %p102 = scmp.ne.s32.totalorder %s94, %s97
      %p103 = scmp.eq.s32.totalorder %s16, 0
      %p104 = por %p102, %p103
      %p105 = scmp.ne.s32.totalorder %s94, %s97
      %p106 = scmp.eq.s32.totalorder %s21, 1
      %p107 = por %p105, %p106
      %p108 = scmp.ne.s32.totalorder %s97, %s98
      %p109 = scmp.eq.s32.totalorder %s21, 0
      %p110 = por %p108, %p109
      %p111 = scmp.ne.s32.totalorder %s97, %s98
      %p112 = scmp.eq.s32.totalorder %s22, 1
      %p113 = por %p111, %p112
      %p115 = scmp.ne.s32.totalorder %s98, %s114
      %p116 = scmp.eq.s32.totalorder %s22, 0
      %p117 = por %p115, %p116
      %s118 = ssub.s32 %s16, %s23
      %p119 = scmp.eq.s32.totalorder %s118, 0
      %s121 = sadd.s32 %s120, 1
      %s122 = scalar_select %p119, %s120, %s121
      %p125 = pneg %p119
      %p126 = scmp.eq.s32.totalorder %s16, 1
      %p127 = por %p125, %p126
      %p128 = scmp.ne.s32.totalorder %s120, %s123
      %p129 = scmp.eq.s32.totalorder %s16, 0
      %p130 = por %p128, %p129
      %p131 = scmp.ne.s32.totalorder %s120, %s123
      %p132 = scmp.eq.s32.totalorder %s21, 1
      %p133 = por %p131, %p132
      %p134 = scmp.ne.s32.totalorder %s123, %s124
      %p135 = scmp.eq.s32.totalorder %s21, 0
      %p136 = por %p134, %p135
      %p137 = scmp.ne.s32.totalorder %s123, %s124
      %p138 = scmp.eq.s32.totalorder %s22, 1
      %p139 = por %p137, %p138
      %p141 = scmp.ne.s32.totalorder %s124, %s140
      %p142 = scmp.eq.s32.totalorder %s22, 0
      %p143 = por %p141, %p142
      %s144 = ssub.s32 %s16, %s23
      %p145 = scmp.eq.s32.totalorder %s144, 0
      %s147 = sadd.s32 %s146, 1
      %s148 = scalar_select %p145, %s146, %s147
      %p151 = pneg %p145
      %p152 = scmp.eq.s32.totalorder %s16, 1
      %p153 = por %p151, %p152
      %p154 = scmp.ne.s32.totalorder %s146, %s149
      %p155 = scmp.eq.s32.totalorder %s16, 0
      %p156 = por %p154, %p155
      %p157 = scmp.ne.s32.totalorder %s146, %s149
      %p158 = scmp.eq.s32.totalorder %s21, 1
      %p159 = por %p157, %p158
      %p160 = scmp.ne.s32.totalorder %s149, %s150
      %p161 = scmp.eq.s32.totalorder %s21, 0
      %p162 = por %p160, %p161
      %p163 = scmp.ne.s32.totalorder %s149, %s150
      %p164 = scmp.eq.s32.totalorder %s22, 1
      %p165 = por %p163, %p164
      %p167 = scmp.ne.s32.totalorder %s150, %s166
      %p168 = scmp.eq.s32.totalorder %s22, 0
      %p169 = por %p167, %p168
      %s170 = ssub.s32 %s16, %s23
      %p171 = scmp.eq.s32.totalorder %s170, 0
      %s173 = sadd.s32 %s172, 1
      %s174 = scalar_select %p171, %s172, %s173
      %p177 = pneg %p171
      %p178 = scmp.eq.s32.totalorder %s16, 1
      %p179 = por %p177, %p178
      %p180 = scmp.ne.s32.totalorder %s172, %s175
      %p181 = scmp.eq.s32.totalorder %s16, 0
      %p182 = por %p180, %p181
      %p183 = scmp.ne.s32.totalorder %s172, %s175
      %p184 = scmp.eq.s32.totalorder %s21, 1
      %p185 = por %p183, %p184
      %p186 = scmp.ne.s32.totalorder %s175, %s176
      %p187 = scmp.eq.s32.totalorder %s21, 0
      %p188 = por %p186, %p187
      %p189 = scmp.ne.s32.totalorder %s175, %s176
      %p190 = scmp.eq.s32.totalorder %s22, 1
      %p191 = por %p189, %p190
      %p193 = scmp.ne.s32.totalorder %s176, %s192
      %p194 = scmp.eq.s32.totalorder %s22, 0
      %p195 = por %p193, %p194
      %s197 = sadd.s32 %s196, 1
      %p200 = scmp.eq.s32.totalorder %s16, 1
      %p201 = scmp.ne.s32.totalorder %s196, %s198
      %p202 = scmp.eq.s32.totalorder %s16, 0
      %p203 = por %p201, %p202
      %p204 = scmp.ne.s32.totalorder %s196, %s198
      %p205 = scmp.eq.s32.totalorder %s21, 1
      %p206 = por %p204, %p205
      %p207 = scmp.ne.s32.totalorder %s198, %s199
      %p208 = scmp.eq.s32.totalorder %s21, 0
      %p209 = por %p207, %p208
      %p210 = scmp.ne.s32.totalorder %s198, %s199
      %p211 = scmp.eq.s32.totalorder %s22, 1
      %p212 = por %p210, %p211
      %p214 = scmp.ne.s32.totalorder %s199, %s213
      %p215 = scmp.eq.s32.totalorder %s22, 0
      %p216 = por %p214, %p215
      %p217 = scmp.le.s32.totalorder 1, %s16
      %p218 = scmp.lt.s32.totalorder %s16, 3
      %p219 = pnand %p217, %p218
      %p220 = pneg %p219
      // Predicated region
      $region9: #{_nlp_sequential_forward.1} parent=5 // pred_check
        _
      $region10: #{_nlp_sequential_forward.1} parent=5 // pred_check_branch
        %222 = sbr.rel (%p219) target = $region12
      $region11: #{_nlp_sequential_forward.1} parent=5 // pred_region
        %s223 = ssub.s32 %s16, 1
        // Predicated region
        $region13: #{_nlp_sequential_forward.1} parent=11 // pred_check
          %p224 = pneg %p37
        $region14: #{_nlp_sequential_forward.1} parent=11 // pred_check_branch
          %226 = sbr.rel (%p224) target = $region16
        $region15: #{_nlp_sequential_forward.1} parent=11 // pred_region
          %s228 = ssub.s32 256, 256
          %229 = vsyncadd [#allocation3], %s228
          %s230 = sshll.u32 [#allocation2], 4
          %s231 = int_to_ptr.vmem [resolvable:$true] %s230
          %236 = dma.hbm_to_vmem [thread:$0]  %s0, 256, %s231, [#allocation3], 128, 128, 8
        $region16: #{_nlp_sequential_forward.1} parent=11 // pred_fallthru
          _
        // Predicated region
        $region17: #{_nlp_sequential_forward.1} parent=11 // pred_check
          %p237 = pneg %p58
        $region18: #{_nlp_sequential_forward.1} parent=11 // pred_check_branch
          %239 = sbr.rel (%p237) target = $region20
        $region19: #{_nlp_sequential_forward.1} parent=11 // pred_region
          %s241 = ssub.s32 32, 32
          %242 = vsyncadd [#allocation6], %s241
          %s244 = sshll.u32 [#allocation5], 4
          %s245 = int_to_ptr.vmem [resolvable:$true] %s244
          %247 = dma.hbm_to_vmem [thread:$0]  %s1, 32, %s245, [#allocation6]
        $region20: #{_nlp_sequential_forward.1} parent=11 // pred_fallthru
          _
      $region12: #{_nlp_sequential_forward.1} parent=5 // pred_fallthru
        _
      %p248 = scmp.lt.s32.totalorder %s16, 2
      // Predicated region
      $region21: #{_nlp_sequential_forward.1} parent=5 // pred_check
        %p249 = pneg %p248
      $region22: #{_nlp_sequential_forward.1} parent=5 // pred_check_branch
        %251 = sbr.rel (%p249) target = $region24
      $region23: #{_nlp_sequential_forward.1} parent=5 // pred_region
        // Predicated region
        $region25: #{_nlp_sequential_forward.1} parent=23 // pred_check
          %p252 = pneg %p78
        $region26: #{_nlp_sequential_forward.1} parent=23 // pred_check_branch
          %254 = sbr.rel (%p252) target = $region28
        $region27: #{_nlp_sequential_forward.1} parent=23 // pred_region
          %p255 = scmp.lt.s32.totalorder %s16, 1
          %s256 = scalar_select %p255, %s16, 1
          %s257 = smul.addr %s256, 4
          %s258 = smul.addr %s257, 8
          %s259 = scalar_lea.vmem %s2, %s258
        $region28: #{_nlp_sequential_forward.1} parent=23 // pred_fallthru
          _
        // Predicated region
        $region29: #{_nlp_sequential_forward.1} parent=23 // pred_check
          %p260 = pneg %p104
        $region30: #{_nlp_sequential_forward.1} parent=23 // pred_check_branch
          %262 = sbr.rel (%p260) target = $region32
        $region31: #{_nlp_sequential_forward.1} parent=23 // pred_region
          %p263 = scmp.lt.s32.totalorder %s16, 1
          %s264 = scalar_select %p263, %s16, 1
          %s265 = smul.addr %s264, 4
          %s266 = smul.addr %s265, 8
          %s267 = scalar_lea.vmem %s3, %s266
        $region32: #{_nlp_sequential_forward.1} parent=23 // pred_fallthru
          _
        // Predicated region
        $region33: #{_nlp_sequential_forward.1} parent=23 // pred_check
          %p268 = pneg %p130
        $region34: #{_nlp_sequential_forward.1} parent=23 // pred_check_branch
          %270 = sbr.rel (%p268) target = $region36
        $region35: #{_nlp_sequential_forward.1} parent=23 // pred_region
          %p271 = scmp.lt.s32.totalorder %s16, 1
          %s272 = scalar_select %p271, %s16, 1
          %s273 = smul.addr %s272, 4
          %s274 = smul.addr %s273, 8
          %s275 = scalar_lea.vmem %s4, %s274
        $region36: #{_nlp_sequential_forward.1} parent=23 // pred_fallthru
          _
        // Predicated region
        $region37: #{_nlp_sequential_forward.1} parent=23 // pred_check
          %p276 = pneg %p156
        $region38: #{_nlp_sequential_forward.1} parent=23 // pred_check_branch
          %278 = sbr.rel (%p276) target = $region40
        $region39: #{_nlp_sequential_forward.1} parent=23 // pred_region
          %p279 = scmp.lt.s32.totalorder %s16, 1
          %s280 = scalar_select %p279, %s16, 1
          %s281 = smul.addr %s280, 8
          %s282 = smul.addr %s281, 8
          %s283 = scalar_lea.vmem %s5, %s282
        $region40: #{_nlp_sequential_forward.1} parent=23 // pred_fallthru
          _
        // Predicated region
        $region41: #{_nlp_sequential_forward.1} parent=23 // pred_check
          %p284 = pneg %p182
        $region42: #{_nlp_sequential_forward.1} parent=23 // pred_check_branch
          %286 = sbr.rel (%p284) target = $region44
        $region43: #{_nlp_sequential_forward.1} parent=23 // pred_region
          %p287 = scmp.lt.s32.totalorder %s16, 1
          %s288 = scalar_select %p287, %s16, 1
          %s289 = smul.addr %s288, 3
          %s290 = scalar_lea.vmem %s6, %s289
        $region44: #{_nlp_sequential_forward.1} parent=23 // pred_fallthru
          _
      $region24: #{_nlp_sequential_forward.1} parent=5 // pred_fallthru
        _
      %p291 = scmp.le.s32.totalorder 1, %s16
      %p292 = scmp.lt.s32.totalorder %s16, 3
      %p293 = pnand %p291, %p292
      %p294 = pneg %p293
      // Predicated region
      $region45: #{_nlp_sequential_forward.1} parent=5 // pred_check
        _
      $region46: #{_nlp_sequential_forward.1} parent=5 // pred_check_branch
        %296 = sbr.rel (%p293) target = $region48
      $region47: #{_nlp_sequential_forward.1} parent=5 // pred_region
        %s297 = ssub.s32 %s16, 1
        // Predicated region
        $region49: #{_nlp_sequential_forward.1} parent=47 // pred_check
          %p298 = pneg %p37
        $region50: #{_nlp_sequential_forward.1} parent=47 // pred_check_branch
          %300 = sbr.rel (%p298) target = $region52
        $region51: #{_nlp_sequential_forward.1} parent=47 // pred_region
          %301 = dma.done [#allocation3], 256
        $region52: #{_nlp_sequential_forward.1} parent=47 // pred_fallthru
          _
        // Predicated region
        $region53: #{_nlp_sequential_forward.1} parent=47 // pred_check
          %p302 = pneg %p58
        $region54: #{_nlp_sequential_forward.1} parent=47 // pred_check_branch
          %304 = sbr.rel (%p302) target = $region56
        $region55: #{_nlp_sequential_forward.1} parent=47 // pred_region
          %305 = dma.done [#allocation6], 32
        $region56: #{_nlp_sequential_forward.1} parent=47 // pred_fallthru
          _
        %p306 = pneg %p37
        %p307 = pneg %p34
        %p308 = pneg %p58
        %p309 = pneg %p55
        %p310 = scmp.lt.s32.totalorder %s21, 1
        %s311 = scalar_select %p310, %s21, 1
        %s312 = smul.addr %s311, 4
        %s313 = smul.addr %s312, 8
        %s314 = scalar_lea.vmem %s2, %s313
        %p315 = pneg %p84
        %p316 = pneg %p81
        %p317 = scmp.lt.s32.totalorder %s21, 1
        %s318 = scalar_select %p317, %s21, 1
        %s319 = smul.addr %s318, 4
        %s320 = smul.addr %s319, 8
        %s321 = scalar_lea.vmem %s3, %s320
        %p322 = pneg %p110
        %p323 = pneg %p107
        %p324 = scmp.lt.s32.totalorder %s21, 1
        %s325 = scalar_select %p324, %s21, 1
        %s326 = smul.addr %s325, 4
        %s327 = smul.addr %s326, 8
        %s328 = scalar_lea.vmem %s4, %s327
        %p329 = pneg %p136
        %p330 = pneg %p133
        %p331 = scmp.lt.s32.totalorder %s21, 1
        %s332 = scalar_select %p331, %s21, 1
        %s333 = smul.addr %s332, 8
        %s334 = smul.addr %s333, 8
        %s335 = scalar_lea.vmem %s5, %s334
        %p336 = pneg %p162
        %p337 = pneg %p159
        %p338 = scmp.lt.s32.totalorder %s21, 1
        %s339 = scalar_select %p338, %s21, 1
        %s340 = smul.addr %s339, 3
        %s341 = scalar_lea.vmem %s6, %s340
        %p342 = pneg %p188
        %p343 = pneg %p185
        %p344 = pneg %p209
        %p345 = pneg %p206
        %p346 = scmp.lt.s32.totalorder %s21, 1
        %s347 = scalar_select %p346, %s21, 1
        %s348 = smul.addr %s347, 4
        %s349 = smul.addr %s348, 8
        %s350 = scalar_lea.vmem %s2, %s349
        %p351 = scmp.lt.s32.totalorder %s21, 1
        %s352 = scalar_select %p351, %s21, 1
        %s353 = smul.addr %s352, 4
        %s354 = smul.addr %s353, 8
        %s355 = scalar_lea.vmem %s3, %s354
        %p356 = scmp.lt.s32.totalorder %s21, 1
        %s357 = scalar_select %p356, %s21, 1
        %s358 = smul.addr %s357, 4
        %s359 = smul.addr %s358, 8
        %s360 = scalar_lea.vmem %s4, %s359
        %p361 = scmp.lt.s32.totalorder %s21, 1
        %s362 = scalar_select %p361, %s21, 1
        %s363 = smul.addr %s362, 8
        %s364 = smul.addr %s363, 8
        %s365 = scalar_lea.vmem %s5, %s364
        %p366 = scmp.lt.s32.totalorder %s21, 1
        %s367 = scalar_select %p366, %s21, 1
        %s368 = smul.addr %s367, 3
        %s369 = scalar_lea.vmem %s6, %s368
        %p370 = scmp.eq.s32.totalorder %s21, 0
        // Predicated region
        $region57: #{_nlp_sequential_forward.1} parent=47 // pred_check
          %p371 = pneg %p370
        $region58: #{_nlp_sequential_forward.1} parent=47 // pred_check_branch
          %373 = sbr.rel (%p371) target = $region60
        $region59: #{_nlp_sequential_forward.1} parent=47 // pred_region
          %v374 = vld [vmem:[#allocation2] sm:$0xff]
          %v375 = vld [vmem:[#allocation2 + $0x8] sm:$0xff]
          %vm376 = vcmask 261120
          %377 = vst.msk [vmem:[#allocation7] sm:$0xff] %vm376, %v374
          %378 = vst.msk [vmem:[#allocation7 + $0x8] sm:$0xff] %vm376, %v375
        $region60: #{_nlp_sequential_forward.1} parent=47 // pred_fallthru
          _
        %v379 = vld [vmem:[#allocation7] sm:$0xff]
        %v380 = vld [vmem:[#allocation7 + $0x8] sm:$0xff]
        %v381 = vld [vmem:[#allocation5] sm:$0x3]
        %v382 = vsub.f32 1.0, %v381
        %v383 = vmul.f32 %v382, -1e+09
        %v386 = vunpack.c.l.s4 1966171168
        %v387 = vunpack.c.0.s8 %v386
        %v388 = vlaneseq
        %v389 = vshrl.u32 %v388, 7
        %v390 = vsub.s32 %v387, %v389
        %v391 = vrot.slane %v383, %v390
        %v392 = vcombine.high %v391, %v391
        %v394 = vunpack.c.l.s4 1966171168
        %v395 = vunpack.c.0.s8 %v394
        %v396 = vlaneseq
        %v397 = vshrl.u32 %v396, 7
        %v398 = vsub.s32 %v395, %v397
        %v399 = vrot.slane %v391, %v398
        %v401 = vunpack.c.l.s4 1966171168
        %v402 = vunpack.c.0.s8 %v401
        %v403 = vlaneseq
        %v404 = vshrl.u32 %v403, 7
        %v405 = vsub.s32 %v402, %v404
        %v406 = vrot.slane %v392, %v405
        %v407 = vld [vmem:[%s350] sm:$0xff]
        %v408 = vld [vmem:[%s350 + $0x8] sm:$0xff]
        %v409 = vld [vmem:[%s350 + $0x10] sm:$0xff]
        %v410 = vld [vmem:[%s350 + $0x18] sm:$0xff]
        %v411 = vld [vmem:[%s355] sm:$0xff]
        %v412 = vld [vmem:[%s355 + $0x8] sm:$0xff]
        %v413 = vld [vmem:[%s355 + $0x10] sm:$0xff]
        %v414 = vld [vmem:[%s355 + $0x18] sm:$0xff]
        %v415 = vld [vmem:[%s360] sm:$0xff]
        %v416 = vld [vmem:[%s360 + $0x8] sm:$0xff]
        %v417 = vld [vmem:[%s360 + $0x10] sm:$0xff]
        %v418 = vld [vmem:[%s360 + $0x18] sm:$0xff]
        %v419 = vld [vmem:[%s365] sm:$0xff]
        %v420 = vld [vmem:[%s365 + $0x8] sm:$0xff]
        %v421 = vld [vmem:[%s365 + $0x10] sm:$0xff]
        %v422 = vld [vmem:[%s365 + $0x18] sm:$0xff]
        %v423 = vld [vmem:[%s365 + $0x20] sm:$0xff]
        %v424 = vld [vmem:[%s365 + $0x28] sm:$0xff]
        %v425 = vld [vmem:[%s365 + $0x30] sm:$0xff]
        %v426 = vld [vmem:[%s365 + $0x38] sm:$0xff]
        %v427 = vld [vmem:[%s369] sm:$0x7]
        %v429 = vlaneseq
        %v430 = vshrl.u32 %v429, 7
        %v431 = vsub.s32 0, %v430
        %v432 = vrot.slane %v427, %v431
        %vm434 = vcmask 261120
        %v436 = vsel %vm434, %v379, 0
        %v439 = vsel %vm434, %v380, 0
        %441 = vmatprep.subr.mxu0 0.0
        %442 = vmatpush1.msra.mxu0 %v407
        %443 = vmatprep.subr.mxu0 0.0
        %444 = vmatpush1.msra.mxu0 %v408
        %445 = vmatprep.subr.mxu0 0.0
        %446 = vmatpush1.msra.mxu0 %v409
        %447 = vmatprep.subr.mxu0 0.0
        %448 = vmatpush1.msra.mxu0 %v410
        %449 = vmatprep.subr.mxu0 0.0
        %450 = vmatpush1.msra.mxu0 0.0
        %451 = vmatprep.subr.mxu0 0.0
        %452 = vmatpush1.msra.mxu0 0.0
        %453 = vmatprep.subr.mxu0 0.0
        %454 = vmatpush1.msra.mxu0 0.0
        %455 = vmatprep.subr.mxu0 0.0
        %456 = vmatpush1.msra.mxu0 0.0
        %457 = vmatprep.subr.mxu0 0.0
        %458 = vmatpush1.msra.mxu0 0.0
        %459 = vmatprep.subr.mxu0 0.0
        %460 = vmatpush1.msra.mxu0 0.0
        %461 = vmatprep.subr.mxu0 0.0
        %462 = vmatpush1.msra.mxu0 0.0
        %463 = vmatprep.subr.mxu0 0.0
        %464 = vmatpush1.msra.mxu0 0.0
        %465 = vmatprep.subr.mxu0 0.0
        %466 = vmatpush1.msra.mxu0 0.0
        %467 = vmatprep.subr.mxu0 0.0
        %468 = vmatpush1.msra.mxu0 0.0
        %469 = vmatprep.subr.mxu0 0.0
        %470 = vmatpush1.msra.mxu0 0.0
        %471 = vmatprep.subr.mxu0 0.0
        %472 = vmatpush1.msra.mxu0 0.0
        %473 = vmatprep.subr.mxu0 0.0
        %474 = vmatpush1.msra.mxu0 0.0
        %475 = vmatprep.subr.mxu0 0.0
        %476 = vmatpush1.msra.mxu0 0.0
        %477 = vmatprep.subr.mxu0 0.0
        %478 = vmatpush1.msra.mxu0 0.0
        %479 = vmatprep.subr.mxu0 0.0
        %480 = vmatpush1.msra.mxu0 0.0
        %481 = vmatprep.subr.mxu0 0.0
        %482 = vmatpush1.msra.mxu0 0.0
        %483 = vmatprep.subr.mxu0 0.0
        %484 = vmatpush1.msra.mxu0 0.0
        %485 = vmatprep.subr.mxu0 0.0
        %486 = vmatpush1.msra.mxu0 0.0
        %487 = vmatprep.subr.mxu0 0.0
        %488 = vmatpush1.msra.mxu0 0.0
        %489 = vmatprep.subr.mxu0 0.0
        %490 = vmatpush1.msra.mxu0 0.0
        %491 = vmatprep.subr.mxu0 0.0
        %492 = vmatpush1.msra.mxu0 0.0
        %493 = vmatprep.subr.mxu0 0.0
        %494 = vmatpush1.msra.mxu0 0.0
        %495 = vmatprep.subr.mxu0 0.0
        %496 = vmatpush1.msra.mxu0 0.0
        %497 = vmatprep.subr.mxu0 0.0
        %498 = vmatpush1.msra.mxu0 0.0
        %499 = vmatprep.subr.mxu0 0.0
        %500 = vmatpush1.msra.mxu0 0.0
        %501 = vmatprep.subr.mxu0 0.0
        %502 = vmatpush1.msra.mxu0 0.0
        %503 = vmatprep.subr.mxu0 0.0
        %504 = vmatpush1.msra.mxu0 0.0
        %505 = vmatprep.mubr.f32.mxu0 0.0
        %506 = vmatmul.mubr.f32.gmra.mrb[0].mxu0 %v436
        %v507 = vpop.f32.mrb[0].mxu0
        %v508 = vadd.f32 %v432, %v507
        %v509 = vpop.f32.mrb[0].mxu0
        %510 = vmatprep.mubr.f32.mxu0 0.0
        %511 = vmatmul.mubr.f32.gmra.mrb[0].mxu0 %v439
        %v512 = vpop.f32.mrb[0].mxu0
        %v513 = vadd.f32 %v432, %v512
        %v514 = vpop.f32.mrb[0].mxu0
        %515 = vdwg.mxu0
        %517 = vrot.lane.b32.xlu0 %v508, 96
        %v518 = vpop.permute.xlu0 %517
        %vm519 = vcmask 64512
        %v520 = vsel %vm519, %v508, 0
        %v522 = vsel %vm519, %v518, 0
        %524 = vmatprep.subr.mxu0 0.0
        %525 = vmatpush1.xpose.msra.mxu0 %v522
        %526 = vmatprep.subr.mxu0 0.0
        %527 = vmatpush1.xpose.msra.mxu0 0.0
        %528 = vmatprep.subr.mxu0 0.0
        %529 = vmatpush1.xpose.msra.mxu0 0.0
        %530 = vmatprep.subr.mxu0 0.0
        %531 = vmatpush1.xpose.msra.mxu0 0.0
        %532 = vmatprep.subr.mxu0 0.0
        %533 = vmatpush1.xpose.msra.mxu0 0.0
        %534 = vmatprep.subr.mxu0 0.0
        %535 = vmatpush1.xpose.msra.mxu0 0.0
        %536 = vmatprep.subr.mxu0 0.0
        %537 = vmatpush1.xpose.msra.mxu0 0.0
        %538 = vmatprep.subr.mxu0 0.0
        %539 = vmatpush1.xpose.msra.mxu0 0.0
        %540 = vmatprep.subr.mxu0 0.0
        %541 = vmatpush1.xpose.msra.mxu0 0.0
        %542 = vmatprep.subr.mxu0 0.0
        %543 = vmatpush1.xpose.msra.mxu0 0.0
        %544 = vmatprep.subr.mxu0 0.0
        %545 = vmatpush1.xpose.msra.mxu0 0.0
        %546 = vmatprep.subr.mxu0 0.0
        %547 = vmatpush1.xpose.msra.mxu0 0.0
        %548 = vmatprep.subr.mxu0 0.0
        %549 = vmatpush1.xpose.msra.mxu0 0.0
        %550 = vmatprep.subr.mxu0 0.0
        %551 = vmatpush1.xpose.msra.mxu0 0.0
        %552 = vmatprep.subr.mxu0 0.0
        %553 = vmatpush1.xpose.msra.mxu0 0.0
        %554 = vmatprep.subr.mxu0 0.0
        %555 = vmatpush1.xpose.msra.mxu0 0.0
        %556 = vmatprep.subr.mxu0 0.0
        %557 = vmatpush1.xpose.msra.mxu0 0.0
        %558 = vmatprep.subr.mxu0 0.0
        %559 = vmatpush1.xpose.msra.mxu0 0.0
        %560 = vmatprep.subr.mxu0 0.0
        %561 = vmatpush1.xpose.msra.mxu0 0.0
        %562 = vmatprep.subr.mxu0 0.0
        %563 = vmatpush1.xpose.msra.mxu0 0.0
        %564 = vmatprep.subr.mxu0 0.0
        %565 = vmatpush1.xpose.msra.mxu0 0.0
        %566 = vmatprep.subr.mxu0 0.0
        %567 = vmatpush1.xpose.msra.mxu0 0.0
        %568 = vmatprep.subr.mxu0 0.0
        %569 = vmatpush1.xpose.msra.mxu0 0.0
        %570 = vmatprep.subr.mxu0 0.0
        %571 = vmatpush1.xpose.msra.mxu0 0.0
        %572 = vmatprep.subr.mxu0 0.0
        %573 = vmatpush1.xpose.msra.mxu0 0.0
        %574 = vmatprep.subr.mxu0 0.0
        %575 = vmatpush1.xpose.msra.mxu0 0.0
        %576 = vmatprep.subr.mxu0 0.0
        %577 = vmatpush1.xpose.msra.mxu0 0.0
        %578 = vmatprep.subr.mxu0 0.0
        %579 = vmatpush1.xpose.msra.mxu0 0.0
        %580 = vmatprep.subr.mxu0 0.0
        %581 = vmatpush1.xpose.msra.mxu0 0.0
        %582 = vmatprep.subr.mxu0 0.0
        %583 = vmatpush1.xpose.msra.mxu0 0.0
        %584 = vmatprep.subr.mxu0 0.0
        %585 = vmatpush1.xpose.msra.mxu0 0.0
        %586 = vmatprep.subr.mxu0 0.0
        %587 = vmatpush1.xpose.msra.mxu0 0.0
        %588 = vmatprep.mubr.f32.mxu0 0.0
        %589 = vmatmul.mubr.f32.gmra.mrb[0].mxu0 %v520
        %v590 = vpop.f32.mrb[0].mxu0
        %v591 = vadd.f32 0.0, %v590
        %v592 = vpop.f32.mrb[0].mxu0
        %593 = vdwg.mxu0
        %595 = vrot.lane.b32.xlu0 %v513, 96
        %v596 = vpop.permute.xlu0 %595
        %v597 = vsel %vm519, %v513, 0
        %v599 = vsel %vm519, %v596, 0
        %601 = vmatprep.subr.mxu0 0.0
        %602 = vmatpush1.xpose.msra.mxu0 %v599
        %603 = vmatprep.subr.mxu0 0.0
        %604 = vmatpush1.xpose.msra.mxu0 0.0
        %605 = vmatprep.subr.mxu0 0.0
        %606 = vmatpush1.xpose.msra.mxu0 0.0
        %607 = vmatprep.subr.mxu0 0.0
        %608 = vmatpush1.xpose.msra.mxu0 0.0
        %609 = vmatprep.subr.mxu0 0.0
        %610 = vmatpush1.xpose.msra.mxu0 0.0
        %611 = vmatprep.subr.mxu0 0.0
        %612 = vmatpush1.xpose.msra.mxu0 0.0
        %613 = vmatprep.subr.mxu0 0.0
        %614 = vmatpush1.xpose.msra.mxu0 0.0
        %615 = vmatprep.subr.mxu0 0.0
        %616 = vmatpush1.xpose.msra.mxu0 0.0
        %617 = vmatprep.subr.mxu0 0.0
        %618 = vmatpush1.xpose.msra.mxu0 0.0
        %619 = vmatprep.subr.mxu0 0.0
        %620 = vmatpush1.xpose.msra.mxu0 0.0
        %621 = vmatprep.subr.mxu0 0.0
        %622 = vmatpush1.xpose.msra.mxu0 0.0
        %623 = vmatprep.subr.mxu0 0.0
        %624 = vmatpush1.xpose.msra.mxu0 0.0
        %625 = vmatprep.subr.mxu0 0.0
        %626 = vmatpush1.xpose.msra.mxu0 0.0
        %627 = vmatprep.subr.mxu0 0.0
        %628 = vmatpush1.xpose.msra.mxu0 0.0
        %629 = vmatprep.subr.mxu0 0.0
        %630 = vmatpush1.xpose.msra.mxu0 0.0
        %631 = vmatprep.subr.mxu0 0.0
        %632 = vmatpush1.xpose.msra.mxu0 0.0
        %633 = vmatprep.subr.mxu0 0.0
        %634 = vmatpush1.xpose.msra.mxu0 0.0
        %635 = vmatprep.subr.mxu0 0.0
        %636 = vmatpush1.xpose.msra.mxu0 0.0
        %637 = vmatprep.subr.mxu0 0.0
        %638 = vmatpush1.xpose.msra.mxu0 0.0
        %639 = vmatprep.subr.mxu0 0.0
        %640 = vmatpush1.xpose.msra.mxu0 0.0
        %641 = vmatprep.subr.mxu0 0.0
        %642 = vmatpush1.xpose.msra.mxu0 0.0
        %643 = vmatprep.subr.mxu0 0.0
        %644 = vmatpush1.xpose.msra.mxu0 0.0
        %645 = vmatprep.subr.mxu0 0.0
        %646 = vmatpush1.xpose.msra.mxu0 0.0
        %647 = vmatprep.subr.mxu0 0.0
        %648 = vmatpush1.xpose.msra.mxu0 0.0
        %649 = vmatprep.subr.mxu0 0.0
        %650 = vmatpush1.xpose.msra.mxu0 0.0
        %651 = vmatprep.subr.mxu0 0.0
        %652 = vmatpush1.xpose.msra.mxu0 0.0
        %653 = vmatprep.subr.mxu0 0.0
        %654 = vmatpush1.xpose.msra.mxu0 0.0
        %655 = vmatprep.subr.mxu0 0.0
        %656 = vmatpush1.xpose.msra.mxu0 0.0
        %657 = vmatprep.subr.mxu0 0.0
        %658 = vmatpush1.xpose.msra.mxu0 0.0
        %659 = vmatprep.subr.mxu0 0.0
        %660 = vmatpush1.xpose.msra.mxu0 0.0
        %661 = vmatprep.subr.mxu0 0.0
        %662 = vmatpush1.xpose.msra.mxu0 0.0
        %663 = vmatprep.subr.mxu0 0.0
        %664 = vmatpush1.xpose.msra.mxu0 0.0
        %665 = vmatprep.mubr.f32.mxu0 0.0
        %666 = vmatmul.mubr.f32.gmra.mrb[0].mxu0 %v597
        %v667 = vpop.f32.mrb[0].mxu0
        %v668 = vadd.f32 0.0, %v667
        %v669 = vpop.f32.mrb[0].mxu0
        %670 = vdwg.mxu0
        %671 = vrot.lane.b32.xlu0 %v508, 120
        %v672 = vpop.permute.xlu0 %671
        %673 = vrot.lane.b32.xlu0 %v508, 88
        %v674 = vpop.permute.xlu0 %673
        %v675 = vsel %vm519, %v672, 0
        %v677 = vsel %vm519, %v674, 0
        %679 = vmatprep.subr.mxu0 0.0
        %680 = vmatpush1.xpose.msra.mxu0 %v677
        %681 = vmatprep.subr.mxu0 0.0
        %682 = vmatpush1.xpose.msra.mxu0 0.0
        %683 = vmatprep.subr.mxu0 0.0
        %684 = vmatpush1.xpose.msra.mxu0 0.0
        %685 = vmatprep.subr.mxu0 0.0
        %686 = vmatpush1.xpose.msra.mxu0 0.0
        %687 = vmatprep.subr.mxu0 0.0
        %688 = vmatpush1.xpose.msra.mxu0 0.0
        %689 = vmatprep.subr.mxu0 0.0
        %690 = vmatpush1.xpose.msra.mxu0 0.0
        %691 = vmatprep.subr.mxu0 0.0
        %692 = vmatpush1.xpose.msra.mxu0 0.0
        %693 = vmatprep.subr.mxu0 0.0
        %694 = vmatpush1.xpose.msra.mxu0 0.0
        %695 = vmatprep.subr.mxu0 0.0
        %696 = vmatpush1.xpose.msra.mxu0 0.0
        %697 = vmatprep.subr.mxu0 0.0
        %698 = vmatpush1.xpose.msra.mxu0 0.0
        %699 = vmatprep.subr.mxu0 0.0
        %700 = vmatpush1.xpose.msra.mxu0 0.0
        %701 = vmatprep.subr.mxu0 0.0
        %702 = vmatpush1.xpose.msra.mxu0 0.0
        %703 = vmatprep.subr.mxu0 0.0
        %704 = vmatpush1.xpose.msra.mxu0 0.0
        %705 = vmatprep.subr.mxu0 0.0
        %706 = vmatpush1.xpose.msra.mxu0 0.0
        %707 = vmatprep.subr.mxu0 0.0
        %708 = vmatpush1.xpose.msra.mxu0 0.0
        %709 = vmatprep.subr.mxu0 0.0
        %710 = vmatpush1.xpose.msra.mxu0 0.0
        %711 = vmatprep.subr.mxu0 0.0
        %712 = vmatpush1.xpose.msra.mxu0 0.0
        %713 = vmatprep.subr.mxu0 0.0
        %714 = vmatpush1.xpose.msra.mxu0 0.0
        %715 = vmatprep.subr.mxu0 0.0
        %716 = vmatpush1.xpose.msra.mxu0 0.0
        %717 = vmatprep.subr.mxu0 0.0
        %718 = vmatpush1.xpose.msra.mxu0 0.0
        %719 = vmatprep.subr.mxu0 0.0
        %720 = vmatpush1.xpose.msra.mxu0 0.0
        %721 = vmatprep.subr.mxu0 0.0
        %722 = vmatpush1.xpose.msra.mxu0 0.0
        %723 = vmatprep.subr.mxu0 0.0
        %724 = vmatpush1.xpose.msra.mxu0 0.0
        %725 = vmatprep.subr.mxu0 0.0
        %726 = vmatpush1.xpose.msra.mxu0 0.0
        %727 = vmatprep.subr.mxu0 0.0
        %728 = vmatpush1.xpose.msra.mxu0 0.0
        %729 = vmatprep.subr.mxu0 0.0
        %730 = vmatpush1.xpose.msra.mxu0 0.0
        %731 = vmatprep.subr.mxu0 0.0
        %732 = vmatpush1.xpose.msra.mxu0 0.0
        %733 = vmatprep.subr.mxu0 0.0
        %734 = vmatpush1.xpose.msra.mxu0 0.0
        %735 = vmatprep.subr.mxu0 0.0
        %736 = vmatpush1.xpose.msra.mxu0 0.0
        %737 = vmatprep.subr.mxu0 0.0
        %738 = vmatpush1.xpose.msra.mxu0 0.0
        %739 = vmatprep.subr.mxu0 0.0
        %740 = vmatpush1.xpose.msra.mxu0 0.0
        %741 = vmatprep.subr.mxu0 0.0
        %742 = vmatpush1.xpose.msra.mxu0 0.0
        %743 = vmatprep.mubr.f32.mxu0 0.0
        %744 = vmatmul.mubr.f32.gmra.mrb[0].mxu0 %v675
        %v745 = vpop.f32.mrb[0].mxu0
        %v746 = vadd.f32 0.0, %v745
        %v747 = vpop.f32.mrb[0].mxu0
        %748 = vdwg.mxu0
        %749 = vrot.lane.b32.xlu0 %v513, 120
        %v750 = vpop.permute.xlu0 %749
        %751 = vrot.lane.b32.xlu0 %v513, 88
        %v752 = vpop.permute.xlu0 %751
        %v753 = vsel %vm519, %v750, 0
        %v755 = vsel %vm519, %v752, 0
        %757 = vmatprep.subr.mxu0 0.0
        %758 = vmatpush1.xpose.msra.mxu0 %v755
        %759 = vmatprep.subr.mxu0 0.0
        %760 = vmatpush1.xpose.msra.mxu0 0.0
        %761 = vmatprep.subr.mxu0 0.0
        %762 = vmatpush1.xpose.msra.mxu0 0.0
        %763 = vmatprep.subr.mxu0 0.0
        %764 = vmatpush1.xpose.msra.mxu0 0.0
        %765 = vmatprep.subr.mxu0 0.0
        %766 = vmatpush1.xpose.msra.mxu0 0.0
        %767 = vmatprep.subr.mxu0 0.0
        %768 = vmatpush1.xpose.msra.mxu0 0.0
        %769 = vmatprep.subr.mxu0 0.0
        %770 = vmatpush1.xpose.msra.mxu0 0.0
        %771 = vmatprep.subr.mxu0 0.0
        %772 = vmatpush1.xpose.msra.mxu0 0.0
        %773 = vmatprep.subr.mxu0 0.0
        %774 = vmatpush1.xpose.msra.mxu0 0.0
        %775 = vmatprep.subr.mxu0 0.0
        %776 = vmatpush1.xpose.msra.mxu0 0.0
        %777 = vmatprep.subr.mxu0 0.0
        %778 = vmatpush1.xpose.msra.mxu0 0.0
        %779 = vmatprep.subr.mxu0 0.0
        %780 = vmatpush1.xpose.msra.mxu0 0.0
        %781 = vmatprep.subr.mxu0 0.0
        %782 = vmatpush1.xpose.msra.mxu0 0.0
        %783 = vmatprep.subr.mxu0 0.0
        %784 = vmatpush1.xpose.msra.mxu0 0.0
        %785 = vmatprep.subr.mxu0 0.0
        %786 = vmatpush1.xpose.msra.mxu0 0.0
        %787 = vmatprep.subr.mxu0 0.0
        %788 = vmatpush1.xpose.msra.mxu0 0.0
        %789 = vmatprep.subr.mxu0 0.0
        %790 = vmatpush1.xpose.msra.mxu0 0.0
        %791 = vmatprep.subr.mxu0 0.0
        %792 = vmatpush1.xpose.msra.mxu0 0.0
        %793 = vmatprep.subr.mxu0 0.0
        %794 = vmatpush1.xpose.msra.mxu0 0.0
        %795 = vmatprep.subr.mxu0 0.0
        %796 = vmatpush1.xpose.msra.mxu0 0.0
        %797 = vmatprep.subr.mxu0 0.0
        %798 = vmatpush1.xpose.msra.mxu0 0.0
        %799 = vmatprep.subr.mxu0 0.0
        %800 = vmatpush1.xpose.msra.mxu0 0.0
        %801 = vmatprep.subr.mxu0 0.0
        %802 = vmatpush1.xpose.msra.mxu0 0.0
        %803 = vmatprep.subr.mxu0 0.0
        %804 = vmatpush1.xpose.msra.mxu0 0.0
        %805 = vmatprep.subr.mxu0 0.0
        %806 = vmatpush1.xpose.msra.mxu0 0.0
        %807 = vmatprep.subr.mxu0 0.0
        %808 = vmatpush1.xpose.msra.mxu0 0.0
        %809 = vmatprep.subr.mxu0 0.0
        %810 = vmatpush1.xpose.msra.mxu0 0.0
        %811 = vmatprep.subr.mxu0 0.0
        %812 = vmatpush1.xpose.msra.mxu0 0.0
        %813 = vmatprep.subr.mxu0 0.0
        %814 = vmatpush1.xpose.msra.mxu0 0.0
        %815 = vmatprep.subr.mxu0 0.0
        %816 = vmatpush1.xpose.msra.mxu0 0.0
        %817 = vmatprep.subr.mxu0 0.0
        %818 = vmatpush1.xpose.msra.mxu0 0.0
        %819 = vmatprep.subr.mxu0 0.0
        %820 = vmatpush1.xpose.msra.mxu0 0.0
        %821 = vmatprep.mubr.f32.mxu0 0.0
        %822 = vmatmul.mubr.f32.gmra.mrb[0].mxu0 %v753
        %v823 = vpop.f32.mrb[0].mxu0
        %v824 = vadd.f32 0.0, %v823
        %v825 = vpop.f32.mrb[0].mxu0
        %826 = vdwg.mxu0
        %827 = vrot.lane.b32.xlu0 %v508, 112
        %v828 = vpop.permute.xlu0 %827
        %829 = vrot.lane.b32.xlu0 %v508, 80
        %v830 = vpop.permute.xlu0 %829
        %v831 = vsel %vm519, %v828, 0
        %v833 = vsel %vm519, %v830, 0
        %835 = vmatprep.subr.mxu0 0.0
        %836 = vmatpush1.xpose.msra.mxu0 %v833
        %837 = vmatprep.subr.mxu0 0.0
        %838 = vmatpush1.xpose.msra.mxu0 0.0
        %839 = vmatprep.subr.mxu0 0.0
        %840 = vmatpush1.xpose.msra.mxu0 0.0
        %841 = vmatprep.subr.mxu0 0.0
        %842 = vmatpush1.xpose.msra.mxu0 0.0
        %843 = vmatprep.subr.mxu0 0.0
        %844 = vmatpush1.xpose.msra.mxu0 0.0
        %845 = vmatprep.subr.mxu0 0.0
        %846 = vmatpush1.xpose.msra.mxu0 0.0
        %847 = vmatprep.subr.mxu0 0.0
        %848 = vmatpush1.xpose.msra.mxu0 0.0
        %849 = vmatprep.subr.mxu0 0.0
        %850 = vmatpush1.xpose.msra.mxu0 0.0
        %851 = vmatprep.subr.mxu0 0.0
        %852 = vmatpush1.xpose.msra.mxu0 0.0
        %853 = vmatprep.subr.mxu0 0.0
        %854 = vmatpush1.xpose.msra.mxu0 0.0
        %855 = vmatprep.subr.mxu0 0.0
        %856 = vmatpush1.xpose.msra.mxu0 0.0
        %857 = vmatprep.subr.mxu0 0.0
        %858 = vmatpush1.xpose.msra.mxu0 0.0
        %859 = vmatprep.subr.mxu0 0.0
        %860 = vmatpush1.xpose.msra.mxu0 0.0
        %861 = vmatprep.subr.mxu0 0.0
        %862 = vmatpush1.xpose.msra.mxu0 0.0
        %863 = vmatprep.subr.mxu0 0.0
        %864 = vmatpush1.xpose.msra.mxu0 0.0
        %865 = vmatprep.subr.mxu0 0.0
        %866 = vmatpush1.xpose.msra.mxu0 0.0
        %867 = vmatprep.subr.mxu0 0.0
        %868 = vmatpush1.xpose.msra.mxu0 0.0
        %869 = vmatprep.subr.mxu0 0.0
        %870 = vmatpush1.xpose.msra.mxu0 0.0
        %871 = vmatprep.subr.mxu0 0.0
        %872 = vmatpush1.xpose.msra.mxu0 0.0
        %873 = vmatprep.subr.mxu0 0.0
        %874 = vmatpush1.xpose.msra.mxu0 0.0
        %875 = vmatprep.subr.mxu0 0.0
        %876 = vmatpush1.xpose.msra.mxu0 0.0
        %877 = vmatprep.subr.mxu0 0.0
        %878 = vmatpush1.xpose.msra.mxu0 0.0
        %879 = vmatprep.subr.mxu0 0.0
        %880 = vmatpush1.xpose.msra.mxu0 0.0
        %881 = vmatprep.subr.mxu0 0.0
        %882 = vmatpush1.xpose.msra.mxu0 0.0
        %883 = vmatprep.subr.mxu0 0.0
        %884 = vmatpush1.xpose.msra.mxu0 0.0
        %885 = vmatprep.subr.mxu0 0.0
        %886 = vmatpush1.xpose.msra.mxu0 0.0
        %887 = vmatprep.subr.mxu0 0.0
        %888 = vmatpush1.xpose.msra.mxu0 0.0
        %889 = vmatprep.subr.mxu0 0.0
        %890 = vmatpush1.xpose.msra.mxu0 0.0
        %891 = vmatprep.subr.mxu0 0.0
        %892 = vmatpush1.xpose.msra.mxu0 0.0
        %893 = vmatprep.subr.mxu0 0.0
        %894 = vmatpush1.xpose.msra.mxu0 0.0
        %895 = vmatprep.subr.mxu0 0.0
        %896 = vmatpush1.xpose.msra.mxu0 0.0
        %897 = vmatprep.subr.mxu0 0.0
        %898 = vmatpush1.xpose.msra.mxu0 0.0
        %899 = vmatprep.mubr.f32.mxu0 0.0
        %900 = vmatmul.mubr.f32.gmra.mrb[0].mxu0 %v831
        %v901 = vpop.f32.mrb[0].mxu0
        %v902 = vadd.f32 0.0, %v901
        %v903 = vpop.f32.mrb[0].mxu0
        %904 = vdwg.mxu0
        %905 = vrot.lane.b32.xlu0 %v513, 112
        %v906 = vpop.permute.xlu0 %905
        %907 = vrot.lane.b32.xlu0 %v513, 80
        %v908 = vpop.permute.xlu0 %907
        %v909 = vsel %vm519, %v906, 0
        %v911 = vsel %vm519, %v908, 0
        %913 = vmatprep.subr.mxu0 0.0
        %914 = vmatpush1.xpose.msra.mxu0 %v911
        %915 = vmatprep.subr.mxu0 0.0
        %916 = vmatpush1.xpose.msra.mxu0 0.0
        %917 = vmatprep.subr.mxu0 0.0
        %918 = vmatpush1.xpose.msra.mxu0 0.0
        %919 = vmatprep.subr.mxu0 0.0
        %920 = vmatpush1.xpose.msra.mxu0 0.0
        %921 = vmatprep.subr.mxu0 0.0
        %922 = vmatpush1.xpose.msra.mxu0 0.0
        %923 = vmatprep.subr.mxu0 0.0
        %924 = vmatpush1.xpose.msra.mxu0 0.0
        %925 = vmatprep.subr.mxu0 0.0
        %926 = vmatpush1.xpose.msra.mxu0 0.0
        %927 = vmatprep.subr.mxu0 0.0
        %928 = vmatpush1.xpose.msra.mxu0 0.0
        %929 = vmatprep.subr.mxu0 0.0
        %930 = vmatpush1.xpose.msra.mxu0 0.0
        %931 = vmatprep.subr.mxu0 0.0
        %932 = vmatpush1.xpose.msra.mxu0 0.0
        %933 = vmatprep.subr.mxu0 0.0
        %934 = vmatpush1.xpose.msra.mxu0 0.0
        %935 = vmatprep.subr.mxu0 0.0
        %936 = vmatpush1.xpose.msra.mxu0 0.0
        %937 = vmatprep.subr.mxu0 0.0
        %938 = vmatpush1.xpose.msra.mxu0 0.0
        %939 = vmatprep.subr.mxu0 0.0
        %940 = vmatpush1.xpose.msra.mxu0 0.0
        %941 = vmatprep.subr.mxu0 0.0
        %942 = vmatpush1.xpose.msra.mxu0 0.0
        %943 = vmatprep.subr.mxu0 0.0
        %944 = vmatpush1.xpose.msra.mxu0 0.0
        %945 = vmatprep.subr.mxu0 0.0
        %946 = vmatpush1.xpose.msra.mxu0 0.0
        %947 = vmatprep.subr.mxu0 0.0
        %948 = vmatpush1.xpose.msra.mxu0 0.0
        %949 = vmatprep.subr.mxu0 0.0
        %950 = vmatpush1.xpose.msra.mxu0 0.0
        %951 = vmatprep.subr.mxu0 0.0
        %952 = vmatpush1.xpose.msra.mxu0 0.0
        %953 = vmatprep.subr.mxu0 0.0
        %954 = vmatpush1.xpose.msra.mxu0 0.0
        %955 = vmatprep.subr.mxu0 0.0
        %956 = vmatpush1.xpose.msra.mxu0 0.0
        %957 = vmatprep.subr.mxu0 0.0
        %958 = vmatpush1.xpose.msra.mxu0 0.0
        %959 = vmatprep.subr.mxu0 0.0
        %960 = vmatpush1.xpose.msra.mxu0 0.0
        %961 = vmatprep.subr.mxu0 0.0
        %962 = vmatpush1.xpose.msra.mxu0 0.0
        %963 = vmatprep.subr.mxu0 0.0
        %964 = vmatpush1.xpose.msra.mxu0 0.0
        %965 = vmatprep.subr.mxu0 0.0
        %966 = vmatpush1.xpose.msra.mxu0 0.0
        %967 = vmatprep.subr.mxu0 0.0
        %968 = vmatpush1.xpose.msra.mxu0 0.0
        %969 = vmatprep.subr.mxu0 0.0
        %970 = vmatpush1.xpose.msra.mxu0 0.0
        %971 = vmatprep.subr.mxu0 0.0
        %972 = vmatpush1.xpose.msra.mxu0 0.0
        %973 = vmatprep.subr.mxu0 0.0
        %974 = vmatpush1.xpose.msra.mxu0 0.0
        %975 = vmatprep.subr.mxu0 0.0
        %976 = vmatpush1.xpose.msra.mxu0 0.0
        %977 = vmatprep.mubr.f32.mxu0 0.0
        %978 = vmatmul.mubr.f32.gmra.mrb[0].mxu0 %v909
        %v979 = vpop.f32.mrb[0].mxu0
        %v980 = vadd.f32 0.0, %v979
        %v981 = vpop.f32.mrb[0].mxu0
        %982 = vdwg.mxu0
        %983 = vrot.lane.b32.xlu0 %v508, 104
        %v984 = vpop.permute.xlu0 %983
        %985 = vrot.lane.b32.xlu0 %v508, 72
        %v986 = vpop.permute.xlu0 %985
        %v987 = vsel %vm519, %v984, 0
        %v989 = vsel %vm519, %v986, 0
        %991 = vmatprep.subr.mxu0 0.0
        %992 = vmatpush1.xpose.msra.mxu0 %v989
        %993 = vmatprep.subr.mxu0 0.0
        %994 = vmatpush1.xpose.msra.mxu0 0.0
        %995 = vmatprep.subr.mxu0 0.0
        %996 = vmatpush1.xpose.msra.mxu0 0.0
        %997 = vmatprep.subr.mxu0 0.0
        %998 = vmatpush1.xpose.msra.mxu0 0.0
        %999 = vmatprep.subr.mxu0 0.0
        %1000 = vmatpush1.xpose.msra.mxu0 0.0
        %1001 = vmatprep.subr.mxu0 0.0
        %1002 = vmatpush1.xpose.msra.mxu0 0.0
        %1003 = vmatprep.subr.mxu0 0.0
        %1004 = vmatpush1.xpose.msra.mxu0 0.0
        %1005 = vmatprep.subr.mxu0 0.0
        %1006 = vmatpush1.xpose.msra.mxu0 0.0
        %1007 = vmatprep.subr.mxu0 0.0
        %1008 = vmatpush1.xpose.msra.mxu0 0.0
        %1009 = vmatprep.subr.mxu0 0.0
        %1010 = vmatpush1.xpose.msra.mxu0 0.0
        %1011 = vmatprep.subr.mxu0 0.0
        %1012 = vmatpush1.xpose.msra.mxu0 0.0
        %1013 = vmatprep.subr.mxu0 0.0
        %1014 = vmatpush1.xpose.msra.mxu0 0.0
        %1015 = vmatprep.subr.mxu0 0.0
        %1016 = vmatpush1.xpose.msra.mxu0 0.0
        %1017 = vmatprep.subr.mxu0 0.0
        %1018 = vmatpush1.xpose.msra.mxu0 0.0
        %1019 = vmatprep.subr.mxu0 0.0
        %1020 = vmatpush1.xpose.msra.mxu0 0.0
        %1021 = vmatprep.subr.mxu0 0.0
        %1022 = vmatpush1.xpose.msra.mxu0 0.0
        %1023 = vmatprep.subr.mxu0 0.0
        %1024 = vmatpush1.xpose.msra.mxu0 0.0
        %1025 = vmatprep.subr.mxu0 0.0
        %1026 = vmatpush1.xpose.msra.mxu0 0.0
        %1027 = vmatprep.subr.mxu0 0.0
        %1028 = vmatpush1.xpose.msra.mxu0 0.0
        %1029 = vmatprep.subr.mxu0 0.0
        %1030 = vmatpush1.xpose.msra.mxu0 0.0
        %1031 = vmatprep.subr.mxu0 0.0
        %1032 = vmatpush1.xpose.msra.mxu0 0.0
        %1033 = vmatprep.subr.mxu0 0.0
        %1034 = vmatpush1.xpose.msra.mxu0 0.0
        %1035 = vmatprep.subr.mxu0 0.0
        %1036 = vmatpush1.xpose.msra.mxu0 0.0
        %1037 = vmatprep.subr.mxu0 0.0
        %1038 = vmatpush1.xpose.msra.mxu0 0.0
        %1039 = vmatprep.subr.mxu0 0.0
        %1040 = vmatpush1.xpose.msra.mxu0 0.0
        %1041 = vmatprep.subr.mxu0 0.0
        %1042 = vmatpush1.xpose.msra.mxu0 0.0
        %1043 = vmatprep.subr.mxu0 0.0
        %1044 = vmatpush1.xpose.msra.mxu0 0.0
        %1045 = vmatprep.subr.mxu0 0.0
        %1046 = vmatpush1.xpose.msra.mxu0 0.0
        %1047 = vmatprep.subr.mxu0 0.0
        %1048 = vmatpush1.xpose.msra.mxu0 0.0
        %1049 = vmatprep.subr.mxu0 0.0
        %1050 = vmatpush1.xpose.msra.mxu0 0.0
        %1051 = vmatprep.subr.mxu0 0.0
        %1052 = vmatpush1.xpose.msra.mxu0 0.0
        %1053 = vmatprep.subr.mxu0 0.0
        %1054 = vmatpush1.xpose.msra.mxu0 0.0
        %1055 = vmatprep.mubr.f32.mxu0 0.0
        %1056 = vmatmul.mubr.f32.gmra.mrb[0].mxu0 %v987
        %v1057 = vpop.f32.mrb[0].mxu0
        %v1058 = vadd.f32 0.0, %v1057
        %v1059 = vpop.f32.mrb[0].mxu0
        %1060 = vdwg.mxu0
        %1061 = vrot.lane.b32.xlu0 %v513, 104
        %v1062 = vpop.permute.xlu0 %1061
        %1063 = vrot.lane.b32.xlu0 %v513, 72
        %v1064 = vpop.permute.xlu0 %1063
        %v1065 = vsel %vm519, %v1062, 0
        %v1067 = vsel %vm519, %v1064, 0
        %1069 = vmatprep.subr.mxu0 0.0
        %1070 = vmatpush1.xpose.msra.mxu0 %v1067
        %1071 = vmatprep.subr.mxu0 0.0
        %1072 = vmatpush1.xpose.msra.mxu0 0.0
        %1073 = vmatprep.subr.mxu0 0.0
        %1074 = vmatpush1.xpose.msra.mxu0 0.0
        %1075 = vmatprep.subr.mxu0 0.0
        %1076 = vmatpush1.xpose.msra.mxu0 0.0
        %1077 = vmatprep.subr.mxu0 0.0
        %1078 = vmatpush1.xpose.msra.mxu0 0.0
        %1079 = vmatprep.subr.mxu0 0.0
        %1080 = vmatpush1.xpose.msra.mxu0 0.0
        %1081 = vmatprep.subr.mxu0 0.0
        %1082 = vmatpush1.xpose.msra.mxu0 0.0
        %1083 = vmatprep.subr.mxu0 0.0
        %1084 = vmatpush1.xpose.msra.mxu0 0.0
        %1085 = vmatprep.subr.mxu0 0.0
        %1086 = vmatpush1.xpose.msra.mxu0 0.0
        %1087 = vmatprep.subr.mxu0 0.0
        %1088 = vmatpush1.xpose.msra.mxu0 0.0
        %1089 = vmatprep.subr.mxu0 0.0
        %1090 = vmatpush1.xpose.msra.mxu0 0.0
        %1091 = vmatprep.subr.mxu0 0.0
        %1092 = vmatpush1.xpose.msra.mxu0 0.0
        %1093 = vmatprep.subr.mxu0 0.0
        %1094 = vmatpush1.xpose.msra.mxu0 0.0
        %1095 = vmatprep.subr.mxu0 0.0
        %1096 = vmatpush1.xpose.msra.mxu0 0.0
        %1097 = vmatprep.subr.mxu0 0.0
        %1098 = vmatpush1.xpose.msra.mxu0 0.0
        %1099 = vmatprep.subr.mxu0 0.0
        %1100 = vmatpush1.xpose.msra.mxu0 0.0
        %1101 = vmatprep.subr.mxu0 0.0
        %1102 = vmatpush1.xpose.msra.mxu0 0.0
        %1103 = vmatprep.subr.mxu0 0.0
        %1104 = vmatpush1.xpose.msra.mxu0 0.0
        %1105 = vmatprep.subr.mxu0 0.0
        %1106 = vmatpush1.xpose.msra.mxu0 0.0
        %1107 = vmatprep.subr.mxu0 0.0
        %1108 = vmatpush1.xpose.msra.mxu0 0.0
        %1109 = vmatprep.subr.mxu0 0.0
        %1110 = vmatpush1.xpose.msra.mxu0 0.0
        %1111 = vmatprep.subr.mxu0 0.0
        %1112 = vmatpush1.xpose.msra.mxu0 0.0
        %1113 = vmatprep.subr.mxu0 0.0
        %1114 = vmatpush1.xpose.msra.mxu0 0.0
        %1115 = vmatprep.subr.mxu0 0.0
        %1116 = vmatpush1.xpose.msra.mxu0 0.0
        %1117 = vmatprep.subr.mxu0 0.0
        %1118 = vmatpush1.xpose.msra.mxu0 0.0
        %1119 = vmatprep.subr.mxu0 0.0
        %1120 = vmatpush1.xpose.msra.mxu0 0.0
        %1121 = vmatprep.subr.mxu0 0.0
        %1122 = vmatpush1.xpose.msra.mxu0 0.0
        %1123 = vmatprep.subr.mxu0 0.0
        %1124 = vmatpush1.xpose.msra.mxu0 0.0
        %1125 = vmatprep.subr.mxu0 0.0
        %1126 = vmatpush1.xpose.msra.mxu0 0.0
        %1127 = vmatprep.subr.mxu0 0.0
        %1128 = vmatpush1.xpose.msra.mxu0 0.0
        %1129 = vmatprep.subr.mxu0 0.0
        %1130 = vmatpush1.xpose.msra.mxu0 0.0
        %1131 = vmatprep.subr.mxu0 0.0
        %1132 = vmatpush1.xpose.msra.mxu0 0.0
        %1133 = vmatprep.mubr.f32.mxu0 0.0
        %1134 = vmatmul.mubr.f32.gmra.mrb[0].mxu0 %v1065
        %v1135 = vpop.f32.mrb[0].mxu0
        %v1136 = vadd.f32 0.0, %v1135
        %v1137 = vpop.f32.mrb[0].mxu0
        %1138 = vdwg.mxu0
        %v1139 = vmul.f32 %v591, 0.35355338
        %v1140 = vmul.f32 %v668, 0.35355338
        %v1141 = vmul.f32 %v746, 0.35355338
        %v1142 = vmul.f32 %v824, 0.35355338
        %v1143 = vmul.f32 %v902, 0.35355338
        %v1144 = vmul.f32 %v980, 0.35355338
        %v1145 = vmul.f32 %v1058, 0.35355338
        %v1146 = vmul.f32 %v1136, 0.35355338
        %v1147 = vlaneseq
        %v1148 = vshrl.u32 %v1147, 7
        %v1149 = vsub.s32 0, %v1148
        %v1150 = vrot.slane %v399, %v1149
        %v1151 = vlaneseq
        %v1152 = vshrl.u32 %v1151, 7
        %v1153 = vsub.s32 0, %v1152
        %v1154 = vrot.slane %v406, %v1153
        %v1157 = vadd.f32 %v1139, %v1150
        %v1158 = vadd.f32 %v1140, %v1154
        %v1159 = vadd.f32 %v1141, %v1150
        %v1160 = vadd.f32 %v1142, %v1154
        %v1161 = vadd.f32 %v1143, %v1150
        %v1162 = vadd.f32 %v1144, %v1154
        %v1163 = vadd.f32 %v1145, %v1150
        %v1164 = vadd.f32 %v1146, %v1154
        %v1165 = vsel %vm519, %v1157, -inf
        %1166 = vmax.xlane.f32.xlu0 %v1165
        %v1167 = vpop.xlane.xlu0 %1166
        %v1168 = vsel %vm519, %v1158, -inf
        %1169 = vmax.xlane.f32.xlu0 %v1168
        %v1170 = vpop.xlane.xlu0 %1169
        %v1171 = vsel %vm519, %v1159, -inf
        %1172 = vmax.xlane.f32.xlu0 %v1171
        %v1173 = vpop.xlane.xlu0 %1172
        %v1174 = vsel %vm519, %v1160, -inf
        %1175 = vmax.xlane.f32.xlu0 %v1174
        %v1176 = vpop.xlane.xlu0 %1175
        %v1177 = vsel %vm519, %v1161, -inf
        %1178 = vmax.xlane.f32.xlu0 %v1177
        %v1179 = vpop.xlane.xlu0 %1178
        %v1180 = vsel %vm519, %v1162, -inf
        %1181 = vmax.xlane.f32.xlu0 %v1180
        %v1182 = vpop.xlane.xlu0 %1181
        %v1183 = vsel %vm519, %v1163, -inf
        %1184 = vmax.xlane.f32.xlu0 %v1183
        %v1185 = vpop.xlane.xlu0 %1184
        %v1186 = vsel %vm519, %v1164, -inf
        %1187 = vmax.xlane.f32.xlu0 %v1186
        %v1188 = vpop.xlane.xlu0 %1187
        %v1189 = vsub.f32 %v1157, %v1167
        %v1190 = vsub.f32 %v1158, %v1170
        %v1191 = vsub.f32 %v1159, %v1173
        %v1192 = vsub.f32 %v1160, %v1176
        %v1193 = vsub.f32 %v1161, %v1179
        %v1194 = vsub.f32 %v1162, %v1182
        %v1195 = vsub.f32 %v1163, %v1185
        %v1196 = vsub.f32 %v1164, %v1188
        %v1197 = vmul.f32 %v1189, 1.442695
        %v1198 = vpow.pop %v1197
        %v1199 = vmul.f32 %v1190, 1.442695
        %v1200 = vpow.pop %v1199
        %v1201 = vmul.f32 %v1191, 1.442695
        %v1202 = vpow.pop %v1201
        %v1203 = vmul.f32 %v1192, 1.442695
        %v1204 = vpow.pop %v1203
        %v1205 = vmul.f32 %v1193, 1.442695
        %v1206 = vpow.pop %v1205
        %v1207 = vmul.f32 %v1194, 1.442695
        %v1208 = vpow.pop %v1207
        %v1209 = vmul.f32 %v1195, 1.442695
        %v1210 = vpow.pop %v1209
        %v1211 = vmul.f32 %v1196, 1.442695
        %v1212 = vpow.pop %v1211
        %v1213 = vsel %vm519, %v1198, 0.0
        %1214 = vadd.xlane.f32.xlu0 %v1213
        %v1215 = vpop.xlane.xlu0 %1214
        %v1216 = vsel %vm519, %v1200, 0.0
        %1217 = vadd.xlane.f32.xlu0 %v1216
        %v1218 = vpop.xlane.xlu0 %1217
        %v1219 = vsel %vm519, %v1202, 0.0
        %1220 = vadd.xlane.f32.xlu0 %v1219
        %v1221 = vpop.xlane.xlu0 %1220
        %v1222 = vsel %vm519, %v1204, 0.0
        %1223 = vadd.xlane.f32.xlu0 %v1222
        %v1224 = vpop.xlane.xlu0 %1223
        %v1225 = vsel %vm519, %v1206, 0.0
        %1226 = vadd.xlane.f32.xlu0 %v1225
        %v1227 = vpop.xlane.xlu0 %1226
        %v1228 = vsel %vm519, %v1208, 0.0
        %1229 = vadd.xlane.f32.xlu0 %v1228
        %v1230 = vpop.xlane.xlu0 %1229
        %v1231 = vsel %vm519, %v1210, 0.0
        %1232 = vadd.xlane.f32.xlu0 %v1231
        %v1233 = vpop.xlane.xlu0 %1232
        %v1234 = vsel %vm519, %v1212, 0.0
        %1235 = vadd.xlane.f32.xlu0 %v1234
        %v1236 = vpop.xlane.xlu0 %1235
        %v1237 = vrcp.pop %v1215
        %v1238 = vrcp.pop %v1218
        %v1239 = vrcp.pop %v1221
        %v1240 = vrcp.pop %v1224
        %v1241 = vrcp.pop %v1227
        %v1242 = vrcp.pop %v1230
        %v1243 = vrcp.pop %v1233
        %v1244 = vrcp.pop %v1236
        %v1245 = vmul.f32 %v1198, %v1237
        %v1246 = vmul.f32 %v1200, %v1238
        %v1247 = vmul.f32 %v1202, %v1239
        %v1248 = vmul.f32 %v1204, %v1240
        %v1249 = vmul.f32 %v1206, %v1241
        %v1250 = vmul.f32 %v1208, %v1242
        %v1251 = vmul.f32 %v1210, %v1243
        %v1252 = vmul.f32 %v1212, %v1244
        %1253 = vrot.lane.b32.xlu0 %v508, 64
        %v1254 = vpop.permute.xlu0 %1253
        %v1257 = vsel %vm519, %v1245, 0
        %1259 = vmatprep.subr.mxu0 0.0
        %1260 = vmatpush1.msra.mxu0 %v1254
        %1261 = vmatprep.subr.mxu0 0.0
        %1262 = vmatpush1.msra.mxu0 0.0
        %1263 = vmatprep.subr.mxu0 0.0
        %1264 = vmatpush1.msra.mxu0 0.0
        %1265 = vmatprep.subr.mxu0 0.0
        %1266 = vmatpush1.msra.mxu0 0.0
        %1267 = vmatprep.subr.mxu0 0.0
        %1268 = vmatpush1.msra.mxu0 0.0
        %1269 = vmatprep.subr.mxu0 0.0
        %1270 = vmatpush1.msra.mxu0 0.0
        %1271 = vmatprep.subr.mxu0 0.0
        %1272 = vmatpush1.msra.mxu0 0.0
        %1273 = vmatprep.subr.mxu0 0.0
        %1274 = vmatpush1.msra.mxu0 0.0
        %1275 = vmatprep.subr.mxu0 0.0
        %1276 = vmatpush1.msra.mxu0 0.0
        %1277 = vmatprep.subr.mxu0 0.0
        %1278 = vmatpush1.msra.mxu0 0.0
        %1279 = vmatprep.subr.mxu0 0.0
        %1280 = vmatpush1.msra.mxu0 0.0
        %1281 = vmatprep.subr.mxu0 0.0
        %1282 = vmatpush1.msra.mxu0 0.0
        %1283 = vmatprep.subr.mxu0 0.0
        %1284 = vmatpush1.msra.mxu0 0.0
        %1285 = vmatprep.subr.mxu0 0.0
        %1286 = vmatpush1.msra.mxu0 0.0
        %1287 = vmatprep.subr.mxu0 0.0
        %1288 = vmatpush1.msra.mxu0 0.0
        %1289 = vmatprep.subr.mxu0 0.0
        %1290 = vmatpush1.msra.mxu0 0.0
        %1291 = vmatprep.subr.mxu0 0.0
        %1292 = vmatpush1.msra.mxu0 0.0
        %1293 = vmatprep.subr.mxu0 0.0
        %1294 = vmatpush1.msra.mxu0 0.0
        %1295 = vmatprep.subr.mxu0 0.0
        %1296 = vmatpush1.msra.mxu0 0.0
        %1297 = vmatprep.subr.mxu0 0.0
        %1298 = vmatpush1.msra.mxu0 0.0
        %1299 = vmatprep.subr.mxu0 0.0
        %1300 = vmatpush1.msra.mxu0 0.0
        %1301 = vmatprep.subr.mxu0 0.0
        %1302 = vmatpush1.msra.mxu0 0.0
        %1303 = vmatprep.subr.mxu0 0.0
        %1304 = vmatpush1.msra.mxu0 0.0
        %1305 = vmatprep.subr.mxu0 0.0
        %1306 = vmatpush1.msra.mxu0 0.0
        %1307 = vmatprep.subr.mxu0 0.0
        %1308 = vmatpush1.msra.mxu0 0.0
        %1309 = vmatprep.subr.mxu0 0.0
        %1310 = vmatpush1.msra.mxu0 0.0
        %1311 = vmatprep.subr.mxu0 0.0
        %1312 = vmatpush1.msra.mxu0 0.0
        %1313 = vmatprep.subr.mxu0 0.0
        %1314 = vmatpush1.msra.mxu0 0.0
        %1315 = vmatprep.subr.mxu0 0.0
        %1316 = vmatpush1.msra.mxu0 0.0
        %1317 = vmatprep.subr.mxu0 0.0
        %1318 = vmatpush1.msra.mxu0 0.0
        %1319 = vmatprep.subr.mxu0 0.0
        %1320 = vmatpush1.msra.mxu0 0.0
        %1321 = vmatprep.subr.mxu0 0.0
        %1322 = vmatpush1.msra.mxu0 0.0
        %1323 = vmatprep.mubr.f32.mxu0 0.0
        %1324 = vmatmul.mubr.f32.gmra.mrb[0].mxu0 %v1257
        %v1325 = vpop.f32.mrb[0].mxu0
        %v1326 = vadd.f32 0.0, %v1325
        %v1327 = vpop.f32.mrb[0].mxu0
        %1328 = vdwg.mxu0
        %1329 = vrot.lane.b32.xlu0 %v513, 64
        %v1330 = vpop.permute.xlu0 %1329
        %v1333 = vsel %vm519, %v1246, 0
        %1335 = vmatprep.subr.mxu0 0.0
        %1336 = vmatpush1.msra.mxu0 %v1330
        %1337 = vmatprep.subr.mxu0 0.0
        %1338 = vmatpush1.msra.mxu0 0.0
        %1339 = vmatprep.subr.mxu0 0.0
        %1340 = vmatpush1.msra.mxu0 0.0
        %1341 = vmatprep.subr.mxu0 0.0
        %1342 = vmatpush1.msra.mxu0 0.0
        %1343 = vmatprep.subr.mxu0 0.0
        %1344 = vmatpush1.msra.mxu0 0.0
        %1345 = vmatprep.subr.mxu0 0.0
        %1346 = vmatpush1.msra.mxu0 0.0
        %1347 = vmatprep.subr.mxu0 0.0
        %1348 = vmatpush1.msra.mxu0 0.0
        %1349 = vmatprep.subr.mxu0 0.0
        %1350 = vmatpush1.msra.mxu0 0.0
        %1351 = vmatprep.subr.mxu0 0.0
        %1352 = vmatpush1.msra.mxu0 0.0
        %1353 = vmatprep.subr.mxu0 0.0
        %1354 = vmatpush1.msra.mxu0 0.0
        %1355 = vmatprep.subr.mxu0 0.0
        %1356 = vmatpush1.msra.mxu0 0.0
        %1357 = vmatprep.subr.mxu0 0.0
        %1358 = vmatpush1.msra.mxu0 0.0
        %1359 = vmatprep.subr.mxu0 0.0
        %1360 = vmatpush1.msra.mxu0 0.0
        %1361 = vmatprep.subr.mxu0 0.0
        %1362 = vmatpush1.msra.mxu0 0.0
        %1363 = vmatprep.subr.mxu0 0.0
        %1364 = vmatpush1.msra.mxu0 0.0
        %1365 = vmatprep.subr.mxu0 0.0
        %1366 = vmatpush1.msra.mxu0 0.0
        %1367 = vmatprep.subr.mxu0 0.0
        %1368 = vmatpush1.msra.mxu0 0.0
        %1369 = vmatprep.subr.mxu0 0.0
        %1370 = vmatpush1.msra.mxu0 0.0
        %1371 = vmatprep.subr.mxu0 0.0
        %1372 = vmatpush1.msra.mxu0 0.0
        %1373 = vmatprep.subr.mxu0 0.0
        %1374 = vmatpush1.msra.mxu0 0.0
        %1375 = vmatprep.subr.mxu0 0.0
        %1376 = vmatpush1.msra.mxu0 0.0
        %1377 = vmatprep.subr.mxu0 0.0
        %1378 = vmatpush1.msra.mxu0 0.0
        %1379 = vmatprep.subr.mxu0 0.0
        %1380 = vmatpush1.msra.mxu0 0.0
        %1381 = vmatprep.subr.mxu0 0.0
        %1382 = vmatpush1.msra.mxu0 0.0
        %1383 = vmatprep.subr.mxu0 0.0
        %1384 = vmatpush1.msra.mxu0 0.0
        %1385 = vmatprep.subr.mxu0 0.0
        %1386 = vmatpush1.msra.mxu0 0.0
        %1387 = vmatprep.subr.mxu0 0.0
        %1388 = vmatpush1.msra.mxu0 0.0
        %1389 = vmatprep.subr.mxu0 0.0
        %1390 = vmatpush1.msra.mxu0 0.0
        %1391 = vmatprep.subr.mxu0 0.0
        %1392 = vmatpush1.msra.mxu0 0.0
        %1393 = vmatprep.subr.mxu0 0.0
        %1394 = vmatpush1.msra.mxu0 0.0
        %1395 = vmatprep.subr.mxu0 0.0
        %1396 = vmatpush1.msra.mxu0 0.0
        %1397 = vmatprep.subr.mxu0 0.0
        %1398 = vmatpush1.msra.mxu0 0.0
        %1399 = vmatprep.mubr.f32.mxu0 0.0
        %1400 = vmatmul.mubr.f32.gmra.mrb[0].mxu0 %v1333
        %v1401 = vpop.f32.mrb[0].mxu0
        %v1402 = vadd.f32 0.0, %v1401
        %v1403 = vpop.f32.mrb[0].mxu0
        %1404 = vdwg.mxu0
        %1405 = vrot.lane.b32.xlu0 %v508, 56
        %v1406 = vpop.permute.xlu0 %1405
        %v1409 = vsel %vm519, %v1247, 0
        %1411 = vmatprep.subr.mxu0 0.0
        %1412 = vmatpush1.msra.mxu0 %v1406
        %1413 = vmatprep.subr.mxu0 0.0
        %1414 = vmatpush1.msra.mxu0 0.0
        %1415 = vmatprep.subr.mxu0 0.0
        %1416 = vmatpush1.msra.mxu0 0.0
        %1417 = vmatprep.subr.mxu0 0.0
        %1418 = vmatpush1.msra.mxu0 0.0
        %1419 = vmatprep.subr.mxu0 0.0
        %1420 = vmatpush1.msra.mxu0 0.0
        %1421 = vmatprep.subr.mxu0 0.0
        %1422 = vmatpush1.msra.mxu0 0.0
        %1423 = vmatprep.subr.mxu0 0.0
        %1424 = vmatpush1.msra.mxu0 0.0
        %1425 = vmatprep.subr.mxu0 0.0
        %1426 = vmatpush1.msra.mxu0 0.0
        %1427 = vmatprep.subr.mxu0 0.0
        %1428 = vmatpush1.msra.mxu0 0.0
        %1429 = vmatprep.subr.mxu0 0.0
        %1430 = vmatpush1.msra.mxu0 0.0
        %1431 = vmatprep.subr.mxu0 0.0
        %1432 = vmatpush1.msra.mxu0 0.0
        %1433 = vmatprep.subr.mxu0 0.0
        %1434 = vmatpush1.msra.mxu0 0.0
        %1435 = vmatprep.subr.mxu0 0.0
        %1436 = vmatpush1.msra.mxu0 0.0
        %1437 = vmatprep.subr.mxu0 0.0
        %1438 = vmatpush1.msra.mxu0 0.0
        %1439 = vmatprep.subr.mxu0 0.0
        %1440 = vmatpush1.msra.mxu0 0.0
        %1441 = vmatprep.subr.mxu0 0.0
        %1442 = vmatpush1.msra.mxu0 0.0
        %1443 = vmatprep.subr.mxu0 0.0
        %1444 = vmatpush1.msra.mxu0 0.0
        %1445 = vmatprep.subr.mxu0 0.0
        %1446 = vmatpush1.msra.mxu0 0.0
        %1447 = vmatprep.subr.mxu0 0.0
        %1448 = vmatpush1.msra.mxu0 0.0
        %1449 = vmatprep.subr.mxu0 0.0
        %1450 = vmatpush1.msra.mxu0 0.0
        %1451 = vmatprep.subr.mxu0 0.0
        %1452 = vmatpush1.msra.mxu0 0.0
        %1453 = vmatprep.subr.mxu0 0.0
        %1454 = vmatpush1.msra.mxu0 0.0
        %1455 = vmatprep.subr.mxu0 0.0
        %1456 = vmatpush1.msra.mxu0 0.0
        %1457 = vmatprep.subr.mxu0 0.0
        %1458 = vmatpush1.msra.mxu0 0.0
        %1459 = vmatprep.subr.mxu0 0.0
        %1460 = vmatpush1.msra.mxu0 0.0
        %1461 = vmatprep.subr.mxu0 0.0
        %1462 = vmatpush1.msra.mxu0 0.0
        %1463 = vmatprep.subr.mxu0 0.0
        %1464 = vmatpush1.msra.mxu0 0.0
        %1465 = vmatprep.subr.mxu0 0.0
        %1466 = vmatpush1.msra.mxu0 0.0
        %1467 = vmatprep.subr.mxu0 0.0
        %1468 = vmatpush1.msra.mxu0 0.0
        %1469 = vmatprep.subr.mxu0 0.0
        %1470 = vmatpush1.msra.mxu0 0.0
        %1471 = vmatprep.subr.mxu0 0.0
        %1472 = vmatpush1.msra.mxu0 0.0
        %1473 = vmatprep.subr.mxu0 0.0
        %1474 = vmatpush1.msra.mxu0 0.0
        %1475 = vmatprep.mubr.f32.mxu0 0.0
        %1476 = vmatmul.mubr.f32.gmra.mrb[0].mxu0 %v1409
        %v1477 = vpop.f32.mrb[0].mxu0
        %v1478 = vadd.f32 0.0, %v1477
        %v1479 = vpop.f32.mrb[0].mxu0
        %1480 = vdwg.mxu0
        %1481 = vrot.lane.b32.xlu0 %v513, 56
        %v1482 = vpop.permute.xlu0 %1481
        %v1485 = vsel %vm519, %v1248, 0
        %1487 = vmatprep.subr.mxu0 0.0
        %1488 = vmatpush1.msra.mxu0 %v1482
        %1489 = vmatprep.subr.mxu0 0.0
        %1490 = vmatpush1.msra.mxu0 0.0
        %1491 = vmatprep.subr.mxu0 0.0
        %1492 = vmatpush1.msra.mxu0 0.0
        %1493 = vmatprep.subr.mxu0 0.0
        %1494 = vmatpush1.msra.mxu0 0.0
        %1495 = vmatprep.subr.mxu0 0.0
        %1496 = vmatpush1.msra.mxu0 0.0
        %1497 = vmatprep.subr.mxu0 0.0
        %1498 = vmatpush1.msra.mxu0 0.0
        %1499 = vmatprep.subr.mxu0 0.0
        %1500 = vmatpush1.msra.mxu0 0.0
        %1501 = vmatprep.subr.mxu0 0.0
        %1502 = vmatpush1.msra.mxu0 0.0
        %1503 = vmatprep.subr.mxu0 0.0
        %1504 = vmatpush1.msra.mxu0 0.0
        %1505 = vmatprep.subr.mxu0 0.0
        %1506 = vmatpush1.msra.mxu0 0.0
        %1507 = vmatprep.subr.mxu0 0.0
        %1508 = vmatpush1.msra.mxu0 0.0
        %1509 = vmatprep.subr.mxu0 0.0
        %1510 = vmatpush1.msra.mxu0 0.0
        %1511 = vmatprep.subr.mxu0 0.0
        %1512 = vmatpush1.msra.mxu0 0.0
        %1513 = vmatprep.subr.mxu0 0.0
        %1514 = vmatpush1.msra.mxu0 0.0
        %1515 = vmatprep.subr.mxu0 0.0
        %1516 = vmatpush1.msra.mxu0 0.0
        %1517 = vmatprep.subr.mxu0 0.0
        %1518 = vmatpush1.msra.mxu0 0.0
        %1519 = vmatprep.subr.mxu0 0.0
        %1520 = vmatpush1.msra.mxu0 0.0
        %1521 = vmatprep.subr.mxu0 0.0
        %1522 = vmatpush1.msra.mxu0 0.0
        %1523 = vmatprep.subr.mxu0 0.0
        %1524 = vmatpush1.msra.mxu0 0.0
        %1525 = vmatprep.subr.mxu0 0.0
        %1526 = vmatpush1.msra.mxu0 0.0
        %1527 = vmatprep.subr.mxu0 0.0
        %1528 = vmatpush1.msra.mxu0 0.0
        %1529 = vmatprep.subr.mxu0 0.0
        %1530 = vmatpush1.msra.mxu0 0.0
        %1531 = vmatprep.subr.mxu0 0.0
        %1532 = vmatpush1.msra.mxu0 0.0
        %1533 = vmatprep.subr.mxu0 0.0
        %1534 = vmatpush1.msra.mxu0 0.0
        %1535 = vmatprep.subr.mxu0 0.0
        %1536 = vmatpush1.msra.mxu0 0.0
        %1537 = vmatprep.subr.mxu0 0.0
        %1538 = vmatpush1.msra.mxu0 0.0
        %1539 = vmatprep.subr.mxu0 0.0
        %1540 = vmatpush1.msra.mxu0 0.0
        %1541 = vmatprep.subr.mxu0 0.0
        %1542 = vmatpush1.msra.mxu0 0.0
        %1543 = vmatprep.subr.mxu0 0.0
        %1544 = vmatpush1.msra.mxu0 0.0
        %1545 = vmatprep.subr.mxu0 0.0
        %1546 = vmatpush1.msra.mxu0 0.0
        %1547 = vmatprep.subr.mxu0 0.0
        %1548 = vmatpush1.msra.mxu0 0.0
        %1549 = vmatprep.subr.mxu0 0.0
        %1550 = vmatpush1.msra.mxu0 0.0
        %1551 = vmatprep.mubr.f32.mxu0 0.0
        %1552 = vmatmul.mubr.f32.gmra.mrb[0].mxu0 %v1485
        %v1553 = vpop.f32.mrb[0].mxu0
        %v1554 = vadd.f32 0.0, %v1553
        %v1555 = vpop.f32.mrb[0].mxu0
        %1556 = vdwg.mxu0
        %1557 = vrot.lane.b32.xlu0 %v508, 48
        %v1558 = vpop.permute.xlu0 %1557
        %v1561 = vsel %vm519, %v1249, 0
        %1563 = vmatprep.subr.mxu0 0.0
        %1564 = vmatpush1.msra.mxu0 %v1558
        %1565 = vmatprep.subr.mxu0 0.0
        %1566 = vmatpush1.msra.mxu0 0.0
        %1567 = vmatprep.subr.mxu0 0.0
        %1568 = vmatpush1.msra.mxu0 0.0
        %1569 = vmatprep.subr.mxu0 0.0
        %1570 = vmatpush1.msra.mxu0 0.0
        %1571 = vmatprep.subr.mxu0 0.0
        %1572 = vmatpush1.msra.mxu0 0.0
        %1573 = vmatprep.subr.mxu0 0.0
        %1574 = vmatpush1.msra.mxu0 0.0
        %1575 = vmatprep.subr.mxu0 0.0
        %1576 = vmatpush1.msra.mxu0 0.0
        %1577 = vmatprep.subr.mxu0 0.0
        %1578 = vmatpush1.msra.mxu0 0.0
        %1579 = vmatprep.subr.mxu0 0.0
        %1580 = vmatpush1.msra.mxu0 0.0
        %1581 = vmatprep.subr.mxu0 0.0
        %1582 = vmatpush1.msra.mxu0 0.0
        %1583 = vmatprep.subr.mxu0 0.0
        %1584 = vmatpush1.msra.mxu0 0.0
        %1585 = vmatprep.subr.mxu0 0.0
        %1586 = vmatpush1.msra.mxu0 0.0
        %1587 = vmatprep.subr.mxu0 0.0
        %1588 = vmatpush1.msra.mxu0 0.0
        %1589 = vmatprep.subr.mxu0 0.0
        %1590 = vmatpush1.msra.mxu0 0.0
        %1591 = vmatprep.subr.mxu0 0.0
        %1592 = vmatpush1.msra.mxu0 0.0
        %1593 = vmatprep.subr.mxu0 0.0
        %1594 = vmatpush1.msra.mxu0 0.0
        %1595 = vmatprep.subr.mxu0 0.0
        %1596 = vmatpush1.msra.mxu0 0.0
        %1597 = vmatprep.subr.mxu0 0.0
        %1598 = vmatpush1.msra.mxu0 0.0
        %1599 = vmatprep.subr.mxu0 0.0
        %1600 = vmatpush1.msra.mxu0 0.0
        %1601 = vmatprep.subr.mxu0 0.0
        %1602 = vmatpush1.msra.mxu0 0.0
        %1603 = vmatprep.subr.mxu0 0.0
        %1604 = vmatpush1.msra.mxu0 0.0
        %1605 = vmatprep.subr.mxu0 0.0
        %1606 = vmatpush1.msra.mxu0 0.0
        %1607 = vmatprep.subr.mxu0 0.0
        %1608 = vmatpush1.msra.mxu0 0.0
        %1609 = vmatprep.subr.mxu0 0.0
        %1610 = vmatpush1.msra.mxu0 0.0
        %1611 = vmatprep.subr.mxu0 0.0
        %1612 = vmatpush1.msra.mxu0 0.0
        %1613 = vmatprep.subr.mxu0 0.0
        %1614 = vmatpush1.msra.mxu0 0.0
        %1615 = vmatprep.subr.mxu0 0.0
        %1616 = vmatpush1.msra.mxu0 0.0
        %1617 = vmatprep.subr.mxu0 0.0
        %1618 = vmatpush1.msra.mxu0 0.0
        %1619 = vmatprep.subr.mxu0 0.0
        %1620 = vmatpush1.msra.mxu0 0.0
        %1621 = vmatprep.subr.mxu0 0.0
        %1622 = vmatpush1.msra.mxu0 0.0
        %1623 = vmatprep.subr.mxu0 0.0
        %1624 = vmatpush1.msra.mxu0 0.0
        %1625 = vmatprep.subr.mxu0 0.0
        %1626 = vmatpush1.msra.mxu0 0.0
        %1627 = vmatprep.mubr.f32.mxu0 0.0
        %1628 = vmatmul.mubr.f32.gmra.mrb[0].mxu0 %v1561
        %v1629 = vpop.f32.mrb[0].mxu0
        %v1630 = vadd.f32 0.0, %v1629
        %v1631 = vpop.f32.mrb[0].mxu0
        %1632 = vdwg.mxu0
        %1633 = vrot.lane.b32.xlu0 %v513, 48
        %v1634 = vpop.permute.xlu0 %1633
        %v1637 = vsel %vm519, %v1250, 0
        %1639 = vmatprep.subr.mxu0 0.0
        %1640 = vmatpush1.msra.mxu0 %v1634
        %1641 = vmatprep.subr.mxu0 0.0
        %1642 = vmatpush1.msra.mxu0 0.0
        %1643 = vmatprep.subr.mxu0 0.0
        %1644 = vmatpush1.msra.mxu0 0.0
        %1645 = vmatprep.subr.mxu0 0.0
        %1646 = vmatpush1.msra.mxu0 0.0
        %1647 = vmatprep.subr.mxu0 0.0
        %1648 = vmatpush1.msra.mxu0 0.0
        %1649 = vmatprep.subr.mxu0 0.0
        %1650 = vmatpush1.msra.mxu0 0.0
        %1651 = vmatprep.subr.mxu0 0.0
        %1652 = vmatpush1.msra.mxu0 0.0
        %1653 = vmatprep.subr.mxu0 0.0
        %1654 = vmatpush1.msra.mxu0 0.0
        %1655 = vmatprep.subr.mxu0 0.0
        %1656 = vmatpush1.msra.mxu0 0.0
        %1657 = vmatprep.subr.mxu0 0.0
        %1658 = vmatpush1.msra.mxu0 0.0
        %1659 = vmatprep.subr.mxu0 0.0
        %1660 = vmatpush1.msra.mxu0 0.0
        %1661 = vmatprep.subr.mxu0 0.0
        %1662 = vmatpush1.msra.mxu0 0.0
        %1663 = vmatprep.subr.mxu0 0.0
        %1664 = vmatpush1.msra.mxu0 0.0
        %1665 = vmatprep.subr.mxu0 0.0
        %1666 = vmatpush1.msra.mxu0 0.0
        %1667 = vmatprep.subr.mxu0 0.0
        %1668 = vmatpush1.msra.mxu0 0.0
        %1669 = vmatprep.subr.mxu0 0.0
        %1670 = vmatpush1.msra.mxu0 0.0
        %1671 = vmatprep.subr.mxu0 0.0
        %1672 = vmatpush1.msra.mxu0 0.0
        %1673 = vmatprep.subr.mxu0 0.0
        %1674 = vmatpush1.msra.mxu0 0.0
        %1675 = vmatprep.subr.mxu0 0.0
        %1676 = vmatpush1.msra.mxu0 0.0
        %1677 = vmatprep.subr.mxu0 0.0
        %1678 = vmatpush1.msra.mxu0 0.0
        %1679 = vmatprep.subr.mxu0 0.0
        %1680 = vmatpush1.msra.mxu0 0.0
        %1681 = vmatprep.subr.mxu0 0.0
        %1682 = vmatpush1.msra.mxu0 0.0
        %1683 = vmatprep.subr.mxu0 0.0
        %1684 = vmatpush1.msra.mxu0 0.0
        %1685 = vmatprep.subr.mxu0 0.0
        %1686 = vmatpush1.msra.mxu0 0.0
        %1687 = vmatprep.subr.mxu0 0.0
        %1688 = vmatpush1.msra.mxu0 0.0
        %1689 = vmatprep.subr.mxu0 0.0
        %1690 = vmatpush1.msra.mxu0 0.0
        %1691 = vmatprep.subr.mxu0 0.0
        %1692 = vmatpush1.msra.mxu0 0.0
        %1693 = vmatprep.subr.mxu0 0.0
        %1694 = vmatpush1.msra.mxu0 0.0
        %1695 = vmatprep.subr.mxu0 0.0
        %1696 = vmatpush1.msra.mxu0 0.0
        %1697 = vmatprep.subr.mxu0 0.0
        %1698 = vmatpush1.msra.mxu0 0.0
        %1699 = vmatprep.subr.mxu0 0.0
        %1700 = vmatpush1.msra.mxu0 0.0
        %1701 = vmatprep.subr.mxu0 0.0
        %1702 = vmatpush1.msra.mxu0 0.0
        %1703 = vmatprep.mubr.f32.mxu0 0.0
        %1704 = vmatmul.mubr.f32.gmra.mrb[0].mxu0 %v1637
        %v1705 = vpop.f32.mrb[0].mxu0
        %v1706 = vadd.f32 0.0, %v1705
        %v1707 = vpop.f32.mrb[0].mxu0
        %1708 = vdwg.mxu0
        %1709 = vrot.lane.b32.xlu0 %v508, 40
        %v1710 = vpop.permute.xlu0 %1709
        %v1713 = vsel %vm519, %v1251, 0
        %1715 = vmatprep.subr.mxu0 0.0
        %1716 = vmatpush1.msra.mxu0 %v1710
        %1717 = vmatprep.subr.mxu0 0.0
        %1718 = vmatpush1.msra.mxu0 0.0
        %1719 = vmatprep.subr.mxu0 0.0
        %1720 = vmatpush1.msra.mxu0 0.0
        %1721 = vmatprep.subr.mxu0 0.0
        %1722 = vmatpush1.msra.mxu0 0.0
        %1723 = vmatprep.subr.mxu0 0.0
        %1724 = vmatpush1.msra.mxu0 0.0
        %1725 = vmatprep.subr.mxu0 0.0
        %1726 = vmatpush1.msra.mxu0 0.0
        %1727 = vmatprep.subr.mxu0 0.0
        %1728 = vmatpush1.msra.mxu0 0.0
        %1729 = vmatprep.subr.mxu0 0.0
        %1730 = vmatpush1.msra.mxu0 0.0
        %1731 = vmatprep.subr.mxu0 0.0
        %1732 = vmatpush1.msra.mxu0 0.0
        %1733 = vmatprep.subr.mxu0 0.0
        %1734 = vmatpush1.msra.mxu0 0.0
        %1735 = vmatprep.subr.mxu0 0.0
        %1736 = vmatpush1.msra.mxu0 0.0
        %1737 = vmatprep.subr.mxu0 0.0
        %1738 = vmatpush1.msra.mxu0 0.0
        %1739 = vmatprep.subr.mxu0 0.0
        %1740 = vmatpush1.msra.mxu0 0.0
        %1741 = vmatprep.subr.mxu0 0.0
        %1742 = vmatpush1.msra.mxu0 0.0
        %1743 = vmatprep.subr.mxu0 0.0
        %1744 = vmatpush1.msra.mxu0 0.0
        %1745 = vmatprep.subr.mxu0 0.0
        %1746 = vmatpush1.msra.mxu0 0.0
        %1747 = vmatprep.subr.mxu0 0.0
        %1748 = vmatpush1.msra.mxu0 0.0
        %1749 = vmatprep.subr.mxu0 0.0
        %1750 = vmatpush1.msra.mxu0 0.0
        %1751 = vmatprep.subr.mxu0 0.0
        %1752 = vmatpush1.msra.mxu0 0.0
        %1753 = vmatprep.subr.mxu0 0.0
        %1754 = vmatpush1.msra.mxu0 0.0
        %1755 = vmatprep.subr.mxu0 0.0
        %1756 = vmatpush1.msra.mxu0 0.0
        %1757 = vmatprep.subr.mxu0 0.0
        %1758 = vmatpush1.msra.mxu0 0.0
        %1759 = vmatprep.subr.mxu0 0.0
        %1760 = vmatpush1.msra.mxu0 0.0
        %1761 = vmatprep.subr.mxu0 0.0
        %1762 = vmatpush1.msra.mxu0 0.0
        %1763 = vmatprep.subr.mxu0 0.0
        %1764 = vmatpush1.msra.mxu0 0.0
        %1765 = vmatprep.subr.mxu0 0.0
        %1766 = vmatpush1.msra.mxu0 0.0
        %1767 = vmatprep.subr.mxu0 0.0
        %1768 = vmatpush1.msra.mxu0 0.0
        %1769 = vmatprep.subr.mxu0 0.0
        %1770 = vmatpush1.msra.mxu0 0.0
        %1771 = vmatprep.subr.mxu0 0.0
        %1772 = vmatpush1.msra.mxu0 0.0
        %1773 = vmatprep.subr.mxu0 0.0
        %1774 = vmatpush1.msra.mxu0 0.0
        %1775 = vmatprep.subr.mxu0 0.0
        %1776 = vmatpush1.msra.mxu0 0.0
        %1777 = vmatprep.subr.mxu0 0.0
        %1778 = vmatpush1.msra.mxu0 0.0
        %1779 = vmatprep.mubr.f32.mxu0 0.0
        %1780 = vmatmul.mubr.f32.gmra.mrb[0].mxu0 %v1713
        %v1781 = vpop.f32.mrb[0].mxu0
        %v1782 = vadd.f32 0.0, %v1781
        %v1783 = vpop.f32.mrb[0].mxu0
        %1784 = vdwg.mxu0
        %1785 = vrot.lane.b32.xlu0 %v513, 40
        %v1786 = vpop.permute.xlu0 %1785
        %v1789 = vsel %vm519, %v1252, 0
        %1791 = vmatprep.subr.mxu0 0.0
        %1792 = vmatpush1.msra.mxu0 %v1786
        %1793 = vmatprep.subr.mxu0 0.0
        %1794 = vmatpush1.msra.mxu0 0.0
        %1795 = vmatprep.subr.mxu0 0.0
        %1796 = vmatpush1.msra.mxu0 0.0
        %1797 = vmatprep.subr.mxu0 0.0
        %1798 = vmatpush1.msra.mxu0 0.0
        %1799 = vmatprep.subr.mxu0 0.0
        %1800 = vmatpush1.msra.mxu0 0.0
        %1801 = vmatprep.subr.mxu0 0.0
        %1802 = vmatpush1.msra.mxu0 0.0
        %1803 = vmatprep.subr.mxu0 0.0
        %1804 = vmatpush1.msra.mxu0 0.0
        %1805 = vmatprep.subr.mxu0 0.0
        %1806 = vmatpush1.msra.mxu0 0.0
        %1807 = vmatprep.subr.mxu0 0.0
        %1808 = vmatpush1.msra.mxu0 0.0
        %1809 = vmatprep.subr.mxu0 0.0
        %1810 = vmatpush1.msra.mxu0 0.0
        %1811 = vmatprep.subr.mxu0 0.0
        %1812 = vmatpush1.msra.mxu0 0.0
        %1813 = vmatprep.subr.mxu0 0.0
        %1814 = vmatpush1.msra.mxu0 0.0
        %1815 = vmatprep.subr.mxu0 0.0
        %1816 = vmatpush1.msra.mxu0 0.0
        %1817 = vmatprep.subr.mxu0 0.0
        %1818 = vmatpush1.msra.mxu0 0.0
        %1819 = vmatprep.subr.mxu0 0.0
        %1820 = vmatpush1.msra.mxu0 0.0
        %1821 = vmatprep.subr.mxu0 0.0
        %1822 = vmatpush1.msra.mxu0 0.0
        %1823 = vmatprep.subr.mxu0 0.0
        %1824 = vmatpush1.msra.mxu0 0.0
        %1825 = vmatprep.subr.mxu0 0.0
        %1826 = vmatpush1.msra.mxu0 0.0
        %1827 = vmatprep.subr.mxu0 0.0
        %1828 = vmatpush1.msra.mxu0 0.0
        %1829 = vmatprep.subr.mxu0 0.0
        %1830 = vmatpush1.msra.mxu0 0.0
        %1831 = vmatprep.subr.mxu0 0.0
        %1832 = vmatpush1.msra.mxu0 0.0
        %1833 = vmatprep.subr.mxu0 0.0
        %1834 = vmatpush1.msra.mxu0 0.0
        %1835 = vmatprep.subr.mxu0 0.0
        %1836 = vmatpush1.msra.mxu0 0.0
        %1837 = vmatprep.subr.mxu0 0.0
        %1838 = vmatpush1.msra.mxu0 0.0
        %1839 = vmatprep.subr.mxu0 0.0
        %1840 = vmatpush1.msra.mxu0 0.0
        %1841 = vmatprep.subr.mxu0 0.0
        %1842 = vmatpush1.msra.mxu0 0.0
        %1843 = vmatprep.subr.mxu0 0.0
        %1844 = vmatpush1.msra.mxu0 0.0
        %1845 = vmatprep.subr.mxu0 0.0
        %1846 = vmatpush1.msra.mxu0 0.0
        %1847 = vmatprep.subr.mxu0 0.0
        %1848 = vmatpush1.msra.mxu0 0.0
        %1849 = vmatprep.subr.mxu0 0.0
        %1850 = vmatpush1.msra.mxu0 0.0
        %1851 = vmatprep.subr.mxu0 0.0
        %1852 = vmatpush1.msra.mxu0 0.0
        %1853 = vmatprep.subr.mxu0 0.0
        %1854 = vmatpush1.msra.mxu0 0.0
        %1855 = vmatprep.mubr.f32.mxu0 0.0
        %1856 = vmatmul.mubr.f32.gmra.mrb[0].mxu0 %v1789
        %v1857 = vpop.f32.mrb[0].mxu0
        %v1858 = vadd.f32 0.0, %v1857
        %v1859 = vpop.f32.mrb[0].mxu0
        %1860 = vdwg.mxu0
        %1863 = vrot.lane.b32.xlu0 %v1478, 8
        %v1864 = vpop.permute.xlu0 %1863
        %1865 = vrot.lane.b32.xlu0 %v1554, 8
        %v1866 = vpop.permute.xlu0 %1865
        %1871 = vrot.lane.b32.xlu0 %v1630, 16
        %v1872 = vpop.permute.xlu0 %1871
        %1873 = vrot.lane.b32.xlu0 %v1706, 16
        %v1874 = vpop.permute.xlu0 %1873
        %1879 = vrot.lane.b32.xlu0 %v1782, 24
        %v1880 = vpop.permute.xlu0 %1879
        %1881 = vrot.lane.b32.xlu0 %v1858, 24
        %v1882 = vpop.permute.xlu0 %1881
        %v1885 = vsel %vm519, %v1326, %v1864
        %v1886 = vsel %vm519, %v1402, %v1866
        %vm1887 = vcmask 130048
        %v1888 = vsel %vm1887, %v1885, %v1872
        %v1889 = vsel %vm1887, %v1886, %v1874
        %vm1890 = vcmask 195584
        %v1891 = vsel %vm1890, %v1888, %v1880
        %v1892 = vsel %vm1890, %v1889, %v1882
        %1893 = vrot.lane.b32.xlu0 %v432, 32
        %v1894 = vpop.permute.xlu0 %1893
        %v1897 = vsel %vm434, %v1891, 0
        %v1900 = vsel %vm434, %v1892, 0
        %1902 = vmatprep.subr.mxu0 0.0
        %1903 = vmatpush1.msra.mxu0 %v411
        %1904 = vmatprep.subr.mxu0 0.0
        %1905 = vmatpush1.msra.mxu0 %v412
        %1906 = vmatprep.subr.mxu0 0.0
        %1907 = vmatpush1.msra.mxu0 %v413
        %1908 = vmatprep.subr.mxu0 0.0
        %1909 = vmatpush1.msra.mxu0 %v414
        %1910 = vmatprep.subr.mxu0 0.0
        %1911 = vmatpush1.msra.mxu0 0.0
        %1912 = vmatprep.subr.mxu0 0.0
        %1913 = vmatpush1.msra.mxu0 0.0
        %1914 = vmatprep.subr.mxu0 0.0
        %1915 = vmatpush1.msra.mxu0 0.0
        %1916 = vmatprep.subr.mxu0 0.0
        %1917 = vmatpush1.msra.mxu0 0.0
        %1918 = vmatprep.subr.mxu0 0.0
        %1919 = vmatpush1.msra.mxu0 0.0
        %1920 = vmatprep.subr.mxu0 0.0
        %1921 = vmatpush1.msra.mxu0 0.0
        %1922 = vmatprep.subr.mxu0 0.0
        %1923 = vmatpush1.msra.mxu0 0.0
        %1924 = vmatprep.subr.mxu0 0.0
        %1925 = vmatpush1.msra.mxu0 0.0
        %1926 = vmatprep.subr.mxu0 0.0
        %1927 = vmatpush1.msra.mxu0 0.0
        %1928 = vmatprep.subr.mxu0 0.0
        %1929 = vmatpush1.msra.mxu0 0.0
        %1930 = vmatprep.subr.mxu0 0.0
        %1931 = vmatpush1.msra.mxu0 0.0
        %1932 = vmatprep.subr.mxu0 0.0
        %1933 = vmatpush1.msra.mxu0 0.0
        %1934 = vmatprep.subr.mxu0 0.0
        %1935 = vmatpush1.msra.mxu0 0.0
        %1936 = vmatprep.subr.mxu0 0.0
        %1937 = vmatpush1.msra.mxu0 0.0
        %1938 = vmatprep.subr.mxu0 0.0
        %1939 = vmatpush1.msra.mxu0 0.0
        %1940 = vmatprep.subr.mxu0 0.0
        %1941 = vmatpush1.msra.mxu0 0.0
        %1942 = vmatprep.subr.mxu0 0.0
        %1943 = vmatpush1.msra.mxu0 0.0
        %1944 = vmatprep.subr.mxu0 0.0
        %1945 = vmatpush1.msra.mxu0 0.0
        %1946 = vmatprep.subr.mxu0 0.0
        %1947 = vmatpush1.msra.mxu0 0.0
        %1948 = vmatprep.subr.mxu0 0.0
        %1949 = vmatpush1.msra.mxu0 0.0
        %1950 = vmatprep.subr.mxu0 0.0
        %1951 = vmatpush1.msra.mxu0 0.0
        %1952 = vmatprep.subr.mxu0 0.0
        %1953 = vmatpush1.msra.mxu0 0.0
        %1954 = vmatprep.subr.mxu0 0.0
        %1955 = vmatpush1.msra.mxu0 0.0
        %1956 = vmatprep.subr.mxu0 0.0
        %1957 = vmatpush1.msra.mxu0 0.0
        %1958 = vmatprep.subr.mxu0 0.0
        %1959 = vmatpush1.msra.mxu0 0.0
        %1960 = vmatprep.subr.mxu0 0.0
        %1961 = vmatpush1.msra.mxu0 0.0
        %1962 = vmatprep.subr.mxu0 0.0
        %1963 = vmatpush1.msra.mxu0 0.0
        %1964 = vmatprep.subr.mxu0 0.0
        %1965 = vmatpush1.msra.mxu0 0.0
        %1966 = vmatprep.mubr.f32.mxu0 0.0
        %1967 = vmatmul.mubr.f32.gmra.mrb[0].mxu0 %v1897
        %v1968 = vpop.f32.mrb[0].mxu0
        %v1969 = vadd.f32 %v1894, %v1968
        %v1970 = vpop.f32.mrb[0].mxu0
        %1971 = vmatprep.mubr.f32.mxu0 0.0
        %1972 = vmatmul.mubr.f32.gmra.mrb[0].mxu0 %v1900
        %v1973 = vpop.f32.mrb[0].mxu0
        %v1974 = vadd.f32 %v1894, %v1973
        %v1975 = vpop.f32.mrb[0].mxu0
        %1976 = vdwg.mxu0
        %v1977 = vadd.f32 %v379, %v1969
        %v1978 = vadd.f32 %v380, %v1974
        %v1979 = vsel %vm434, %v1977, 0.0
        %1980 = vadd.xlane.f32.xlu0 %v1979
        %v1981 = vpop.xlane.xlu0 %1980
        %v1982 = vsel %vm434, %v1978, 0.0
        %1983 = vadd.xlane.f32.xlu0 %v1982
        %v1984 = vpop.xlane.xlu0 %1983
        %v1985 = vrcp.pop 32.0
        %v1986 = vmul.f32 %v1981, %v1985
        %v1987 = vmul.f32 %v1984, %v1985
        %v1988 = vsub.f32 %v1977, %v1986
        %v1989 = vsub.f32 %v1978, %v1987
        %v1990 = vmul.f32 %v1988, %v1988
        %v1991 = vmul.f32 %v1989, %v1989
        %v1992 = vsel %vm434, %v1990, 0.0
        %1993 = vadd.xlane.f32.xlu0 %v1992
        %v1994 = vpop.xlane.xlu0 %1993
        %v1995 = vsel %vm434, %v1991, 0.0
        %1996 = vadd.xlane.f32.xlu0 %v1995
        %v1997 = vpop.xlane.xlu0 %1996
        %v1998 = vmul.f32 %v1994, %v1985
        %v1999 = vmul.f32 %v1997, %v1985
        %v2000 = vadd.f32 %v1998, 1e-12
        %v2001 = vadd.f32 %v1999, 1e-12
        %v2002 = vrsqrt.pop %v2000
        %v2003 = vrsqrt.pop %v2001
        %v2004 = vmul.f32 %v1988, %v2002
        %v2005 = vmul.f32 %v1989, %v2003
        %v2006 = vrot.slane %v427, 1
        %v2007 = vlaneseq
        %v2008 = vshrl.u32 %v2007, 7
        %v2009 = vsub.s32 0, %v2008
        %v2010 = vrot.slane %v2006, %v2009
        %v2012 = vmul.f32 %v2004, %v2010
        %v2013 = vmul.f32 %v2005, %v2010
        %2014 = vrot.lane.b32.xlu0 %v427, 96
        %v2015 = vpop.permute.xlu0 %2014
        %v2016 = vrot.slane %v2015, 1
        %v2017 = vlaneseq
        %v2018 = vshrl.u32 %v2017, 7
        %v2019 = vsub.s32 0, %v2018
        %v2020 = vrot.slane %v2016, %v2019
        %v2022 = vadd.f32 %v2012, %v2020
        %v2023 = vadd.f32 %v2013, %v2020
        %2024 = vrot.lane.b32.xlu0 %v427, 64
        %v2025 = vpop.permute.xlu0 %2024
        %v2026 = vrot.slane %v2025, 1
        %v2027 = vlaneseq
        %v2028 = vshrl.u32 %v2027, 7
        %v2029 = vsub.s32 0, %v2028
        %v2030 = vrot.slane %v2026, %v2029
        %v2033 = vsel %vm434, %v2022, 0
        %v2036 = vsel %vm434, %v2023, 0
        %2038 = vmatprep.subr.mxu0 0.0
        %2039 = vmatpush1.msra.mxu0 %v415
        %2040 = vmatprep.subr.mxu0 0.0
        %2041 = vmatpush1.msra.mxu0 %v416
        %2042 = vmatprep.subr.mxu0 0.0
        %2043 = vmatpush1.msra.mxu0 %v417
        %2044 = vmatprep.subr.mxu0 0.0
        %2045 = vmatpush1.msra.mxu0 %v418
        %2046 = vmatprep.subr.mxu0 0.0
        %2047 = vmatpush1.msra.mxu0 0.0
        %2048 = vmatprep.subr.mxu0 0.0
        %2049 = vmatpush1.msra.mxu0 0.0
        %2050 = vmatprep.subr.mxu0 0.0
        %2051 = vmatpush1.msra.mxu0 0.0
        %2052 = vmatprep.subr.mxu0 0.0
        %2053 = vmatpush1.msra.mxu0 0.0
        %2054 = vmatprep.subr.mxu0 0.0
        %2055 = vmatpush1.msra.mxu0 0.0
        %2056 = vmatprep.subr.mxu0 0.0
        %2057 = vmatpush1.msra.mxu0 0.0
        %2058 = vmatprep.subr.mxu0 0.0
        %2059 = vmatpush1.msra.mxu0 0.0
        %2060 = vmatprep.subr.mxu0 0.0
        %2061 = vmatpush1.msra.mxu0 0.0
        %2062 = vmatprep.subr.mxu0 0.0
        %2063 = vmatpush1.msra.mxu0 0.0
        %2064 = vmatprep.subr.mxu0 0.0
        %2065 = vmatpush1.msra.mxu0 0.0
        %2066 = vmatprep.subr.mxu0 0.0
        %2067 = vmatpush1.msra.mxu0 0.0
        %2068 = vmatprep.subr.mxu0 0.0
        %2069 = vmatpush1.msra.mxu0 0.0
        %2070 = vmatprep.subr.mxu0 0.0
        %2071 = vmatpush1.msra.mxu0 0.0
        %2072 = vmatprep.subr.mxu0 0.0
        %2073 = vmatpush1.msra.mxu0 0.0
        %2074 = vmatprep.subr.mxu0 0.0
        %2075 = vmatpush1.msra.mxu0 0.0
        %2076 = vmatprep.subr.mxu0 0.0
        %2077 = vmatpush1.msra.mxu0 0.0
        %2078 = vmatprep.subr.mxu0 0.0
        %2079 = vmatpush1.msra.mxu0 0.0
        %2080 = vmatprep.subr.mxu0 0.0
        %2081 = vmatpush1.msra.mxu0 0.0
        %2082 = vmatprep.subr.mxu0 0.0
        %2083 = vmatpush1.msra.mxu0 0.0
        %2084 = vmatprep.subr.mxu0 0.0
        %2085 = vmatpush1.msra.mxu0 0.0
        %2086 = vmatprep.subr.mxu0 0.0
        %2087 = vmatpush1.msra.mxu0 0.0
        %2088 = vmatprep.subr.mxu0 0.0
        %2089 = vmatpush1.msra.mxu0 0.0
        %2090 = vmatprep.subr.mxu0 0.0
        %2091 = vmatpush1.msra.mxu0 0.0
        %2092 = vmatprep.subr.mxu0 0.0
        %2093 = vmatpush1.msra.mxu0 0.0
        %2094 = vmatprep.subr.mxu0 0.0
        %2095 = vmatpush1.msra.mxu0 0.0
        %2096 = vmatprep.subr.mxu0 0.0
        %2097 = vmatpush1.msra.mxu0 0.0
        %2098 = vmatprep.subr.mxu0 0.0
        %2099 = vmatpush1.msra.mxu0 0.0
        %2100 = vmatprep.subr.mxu0 0.0
        %2101 = vmatpush1.msra.mxu0 0.0
        %2102 = vmatprep.mubr.f32.mxu0 0.0
        %2103 = vmatmul.mubr.f32.gmra.mrb[0].mxu0 %v2033
        %v2104 = vpop.f32.mrb[0].mxu0
        %v2105 = vadd.f32 %v2030, %v2104
        %v2106 = vpop.f32.mrb[0].mxu0
        %2107 = vmatprep.mubr.f32.mxu0 0.0
        %2108 = vmatmul.mubr.f32.gmra.mrb[0].mxu0 %v2036
        %v2109 = vpop.f32.mrb[0].mxu0
        %v2110 = vadd.f32 %v2030, %v2109
        %v2111 = vpop.f32.mrb[0].mxu0
        %2112 = vdwg.mxu0
        %v2113 = vmul.f32 %v2105, 0.5
        %v2114 = vmul.f32 %v2110, 0.5
        %v2115 = vmul.f32 %v2105, 0.044715
        %v2116 = vmul.f32 %v2110, 0.044715
        %v2117 = vmul.f32 %v2115, %v2105
        %v2118 = vmul.f32 %v2116, %v2110
        %v2119 = vmul.f32 %v2117, %v2105
        %v2120 = vmul.f32 %v2118, %v2110
        %v2121 = vadd.f32 %v2105, %v2119
        %v2122 = vadd.f32 %v2110, %v2120
        %v2123 = vmul.f32 %v2121, 0.7978846
        %v2124 = vmul.f32 %v2122, 0.7978846
        %v2125 = vtanh.pop %v2123
        %v2126 = vtanh.pop %v2124
        %v2127 = vadd.f32 %v2125, 1.0
        %v2128 = vadd.f32 %v2126, 1.0
        %v2129 = vmul.f32 %v2113, %v2127
        %v2130 = vmul.f32 %v2114, %v2128
        %v2131 = vrot.slane %v427, 2
        %v2132 = vlaneseq
        %v2133 = vshrl.u32 %v2132, 7
        %v2134 = vsub.s32 0, %v2133
        %v2135 = vrot.slane %v2131, %v2134
        %vm2137 = vcmask 523264
        %v2139 = vsel %vm2137, %v2129, 0
        %v2142 = vsel %vm2137, %v2130, 0
        %2144 = vmatprep.subr.mxu0 0.0
        %2145 = vmatpush1.msra.mxu0 %v419
        %2146 = vmatprep.subr.mxu0 0.0
        %2147 = vmatpush1.msra.mxu0 %v420
        %2148 = vmatprep.subr.mxu0 0.0
        %2149 = vmatpush1.msra.mxu0 %v421
        %2150 = vmatprep.subr.mxu0 0.0
        %2151 = vmatpush1.msra.mxu0 %v422
        %2152 = vmatprep.subr.mxu0 0.0
        %2153 = vmatpush1.msra.mxu0 %v423
        %2154 = vmatprep.subr.mxu0 0.0
        %2155 = vmatpush1.msra.mxu0 %v424
        %2156 = vmatprep.subr.mxu0 0.0
        %2157 = vmatpush1.msra.mxu0 %v425
        %2158 = vmatprep.subr.mxu0 0.0
        %2159 = vmatpush1.msra.mxu0 %v426
        %2160 = vmatprep.subr.mxu0 0.0
        %2161 = vmatpush1.msra.mxu0 0.0
        %2162 = vmatprep.subr.mxu0 0.0
        %2163 = vmatpush1.msra.mxu0 0.0
        %2164 = vmatprep.subr.mxu0 0.0
        %2165 = vmatpush1.msra.mxu0 0.0
        %2166 = vmatprep.subr.mxu0 0.0
        %2167 = vmatpush1.msra.mxu0 0.0
        %2168 = vmatprep.subr.mxu0 0.0
        %2169 = vmatpush1.msra.mxu0 0.0
        %2170 = vmatprep.subr.mxu0 0.0
        %2171 = vmatpush1.msra.mxu0 0.0
        %2172 = vmatprep.subr.mxu0 0.0
        %2173 = vmatpush1.msra.mxu0 0.0
        %2174 = vmatprep.subr.mxu0 0.0
        %2175 = vmatpush1.msra.mxu0 0.0
        %2176 = vmatprep.subr.mxu0 0.0
        %2177 = vmatpush1.msra.mxu0 0.0
        %2178 = vmatprep.subr.mxu0 0.0
        %2179 = vmatpush1.msra.mxu0 0.0
        %2180 = vmatprep.subr.mxu0 0.0
        %2181 = vmatpush1.msra.mxu0 0.0
        %2182 = vmatprep.subr.mxu0 0.0
        %2183 = vmatpush1.msra.mxu0 0.0
        %2184 = vmatprep.subr.mxu0 0.0
        %2185 = vmatpush1.msra.mxu0 0.0
        %2186 = vmatprep.subr.mxu0 0.0
        %2187 = vmatpush1.msra.mxu0 0.0
        %2188 = vmatprep.subr.mxu0 0.0
        %2189 = vmatpush1.msra.mxu0 0.0
        %2190 = vmatprep.subr.mxu0 0.0
        %2191 = vmatpush1.msra.mxu0 0.0
        %2192 = vmatprep.subr.mxu0 0.0
        %2193 = vmatpush1.msra.mxu0 0.0
        %2194 = vmatprep.subr.mxu0 0.0
        %2195 = vmatpush1.msra.mxu0 0.0
        %2196 = vmatprep.subr.mxu0 0.0
        %2197 = vmatpush1.msra.mxu0 0.0
        %2198 = vmatprep.subr.mxu0 0.0
        %2199 = vmatpush1.msra.mxu0 0.0
        %2200 = vmatprep.subr.mxu0 0.0
        %2201 = vmatpush1.msra.mxu0 0.0
        %2202 = vmatprep.subr.mxu0 0.0
        %2203 = vmatpush1.msra.mxu0 0.0
        %2204 = vmatprep.subr.mxu0 0.0
        %2205 = vmatpush1.msra.mxu0 0.0
        %2206 = vmatprep.subr.mxu0 0.0
        %2207 = vmatpush1.msra.mxu0 0.0
        %2208 = vmatprep.mubr.f32.mxu0 0.0
        %2209 = vmatmul.mubr.f32.gmra.mrb[0].mxu0 %v2139
        %v2210 = vpop.f32.mrb[0].mxu0
        %v2211 = vadd.f32 %v2135, %v2210
        %v2212 = vpop.f32.mrb[0].mxu0
        %2213 = vmatprep.mubr.f32.mxu0 0.0
        %2214 = vmatmul.mubr.f32.gmra.mrb[0].mxu0 %v2142
        %v2215 = vpop.f32.mrb[0].mxu0
        %v2216 = vadd.f32 %v2135, %v2215
        %v2217 = vpop.f32.mrb[0].mxu0
        %2218 = vdwg.mxu0
        %v2219 = vadd.f32 %v2022, %v2211
        %v2220 = vadd.f32 %v2023, %v2216
        %v2221 = vsel %vm434, %v2219, 0.0
        %2222 = vadd.xlane.f32.xlu0 %v2221
        %v2223 = vpop.xlane.xlu0 %2222
        %v2224 = vsel %vm434, %v2220, 0.0
        %2225 = vadd.xlane.f32.xlu0 %v2224
        %v2226 = vpop.xlane.xlu0 %2225
        %v2227 = vmul.f32 %v2223, %v1985
        %v2228 = vmul.f32 %v2226, %v1985
        %v2229 = vsub.f32 %v2219, %v2227
        %v2230 = vsub.f32 %v2220, %v2228
        %v2231 = vmul.f32 %v2229, %v2229
        %v2232 = vmul.f32 %v2230, %v2230
        %v2233 = vsel %vm434, %v2231, 0.0
        %2234 = vadd.xlane.f32.xlu0 %v2233
        %v2235 = vpop.xlane.xlu0 %2234
        %v2236 = vsel %vm434, %v2232, 0.0
        %2237 = vadd.xlane.f32.xlu0 %v2236
        %v2238 = vpop.xlane.xlu0 %2237
        %v2239 = vmul.f32 %v2235, %v1985
        %v2240 = vmul.f32 %v2238, %v1985
        %v2241 = vadd.f32 %v2239, 1e-12
        %v2242 = vadd.f32 %v2240, 1e-12
        %v2243 = vrsqrt.pop %v2241
        %v2244 = vrsqrt.pop %v2242
        %v2245 = vmul.f32 %v2229, %v2243
        %v2246 = vmul.f32 %v2230, %v2244
        %v2247 = vrot.slane %v2015, 2
        %v2248 = vlaneseq
        %v2249 = vshrl.u32 %v2248, 7
        %v2250 = vsub.s32 0, %v2249
        %v2251 = vrot.slane %v2247, %v2250
        %v2253 = vmul.f32 %v2245, %v2251
        %v2254 = vmul.f32 %v2246, %v2251
        %v2255 = vrot.slane %v2025, 2
        %v2256 = vlaneseq
        %v2257 = vshrl.u32 %v2256, 7
        %v2258 = vsub.s32 0, %v2257
        %v2259 = vrot.slane %v2255, %v2258
        %v2261 = vadd.f32 %v2253, %v2259
        %v2262 = vadd.f32 %v2254, %v2259
        %2263 = vst.msk [vmem:[#allocation7] sm:$0xff] %vm434, %v2261
        %2264 = vst.msk [vmem:[#allocation7 + $0x8] sm:$0xff] %vm434, %v2262
        // Predicated region
        $region61: #{_nlp_sequential_forward.1} parent=47 // pred_check
          %p2265 = pneg %p206
        $region62: #{_nlp_sequential_forward.1} parent=47 // pred_check_branch
          %2267 = sbr.rel (%p2265) target = $region64
        $region63: #{_nlp_sequential_forward.1} parent=47 // pred_region
          %s2269 = ssub.s32 256, 256
          %2270 = vsyncadd [#allocation4], %s2269
          %s2271 = sshll.u32 [#allocation7], 4
          %s2272 = int_to_ptr.vmem [resolvable:$true] %s2271
          %2277 = dma.vmem_to_hbm [thread:$0]  %s2272, 256, %s7, [#allocation4], 128, 128, 8
        $region64: #{_nlp_sequential_forward.1} parent=47 // pred_fallthru
          _
        // Predicated region
        $region65: #{_nlp_sequential_forward.1} parent=47 // pred_check
          %p2278 = pneg %p206
        $region66: #{_nlp_sequential_forward.1} parent=47 // pred_check_branch
          %2280 = sbr.rel (%p2278) target = $region68
        $region67: #{_nlp_sequential_forward.1} parent=47 // pred_region
          %2281 = dma.done [#allocation4], 256
        $region68: #{_nlp_sequential_forward.1} parent=47 // pred_fallthru
          _
      $region48: #{_nlp_sequential_forward.1} parent=5 // pred_fallthru
        _
      %p2282 = scmp.le.s32.totalorder 2, %s16
      // Predicated region
      $region69: #{_nlp_sequential_forward.1} parent=5 // pred_check
        %p2283 = pneg %p2282
      $region70: #{_nlp_sequential_forward.1} parent=5 // pred_check_branch
        %2285 = sbr.rel (%p2283) target = $region72
      $region71: #{_nlp_sequential_forward.1} parent=5 // pred_region
        %s2286 = ssub.s32 %s16, 2
      $region72: #{_nlp_sequential_forward.1} parent=5 // pred_fallthru
        _
    $region6: #{_nlp_sequential_forward.1} parent=1 // loop_footer
      %s20 = sadd.s32 1, %s16
    $region7: #{_nlp_sequential_forward.1} parent=1 // loop_footer_branch
      %15 = sbr.rel target = $region3
    $region8: #{_nlp_sequential_forward.1} parent=1 // loop_exit
      _
    %2287 = vsyncpa [#allocation3], 1
    %s2288 = scalar_lea.sflag [#allocation3], 1
    %2289 = vsyncpa %s2288, 1
    %2290 = vsyncpa [#allocation6], 1
    %2291 = vsyncpa [#allocation4], 1
    %s2292 = scalar_lea.sflag [#allocation4], 1
    %2293 = vsyncpa %s2292, 1

</llo_original>
